<compile_context>
chip_gen: v7x
topology: tpu7x:2x2x1
jax: 0.10.0
libtpu: 0.0.40
codegen_flags: <defaults>
</compile_context>

<pallas_src>
import functools

import jax
import jax.numpy as jnp
from jax import lax
from jax.experimental import pallas as pl
from jax.experimental.pallas import tpu as pltpu


def _prelu(x, alpha):
    return jnp.where(x > 0, x, alpha * x)


def _bottleneck_kernel(x1_ref, x2_ref, mask_ref, w1_ref, w2_ref, w3_ref,
                       b1_ref, b2_ref, b3_ref, alpha_ref,
                       out_ref, h1p_ref, *, dilation, width, pad):
    """Fused ENet bottleneck body for one image of the batch.

    Layout: channel-major, spatial-minor (lane dim = H*W).
    x1_ref  : (1, Cin,  H*W)  bf16, conv1 input
    x2_ref  : (1, Cout, H*W)  f32,  residual input
    mask_ref: (2, H*W)        bf16, column-validity masks for the +/-d horizontal taps
    w1_ref  : (Cmid, Cin)     bf16, 1x1 conv (transposed), BN1 scale folded in
    w2_ref  : (9, Cmid, Cmid) bf16, 3x3 taps [tap, cout, cin], tap = ky*3+kx, BN2 folded
    w3_ref  : (Cout, Cmid)    bf16, 1x1 conv (transposed), BN3 scale folded in
    b*_ref  : (C, 1)          f32, folded BN biases
    alpha_ref : SMEM (3,)     f32 PReLU slopes for conv1 / conv2 / final act
    h1p_ref : VMEM (Cmid, pad + H*W + pad) bf16 — conv1 output with a zero flat halo
    """
    d = dilation
    W = width
    HW = x1_ref.shape[2]
    Cmid = w1_ref.shape[0]

    a1 = alpha_ref[0]
    a2 = alpha_ref[1]
    a3 = alpha_ref[2]

    # ---- conv1: 1x1 conv (bf16 matmul, f32 acc) + BN bias + PReLU -----------------
    h1 = jnp.dot(w1_ref[...], x1_ref[0], preferred_element_type=jnp.float32)
    h1 = _prelu(h1 + b1_ref[...], a1)

    # Zero only the two halo strips (lane-tile aligned, tiny); the interior is fully
    # overwritten every step.  The zero halo reproduces conv2's zero padding for the
    # vertical out-of-image taps (it must stay exactly 0: PReLU(BN(0)) != 0).
    zero_halo = jnp.zeros((Cmid, pad), h1p_ref.dtype)
    h1p_ref[:, 0:pad] = zero_halo
    h1p_ref[:, pad + HW:pad + HW + pad] = zero_halo
    # Interior write starts at lane offset `pad` (multiple of 128) -> unmasked stores.
    h1p_ref[:, pad:pad + HW] = h1.astype(h1p_ref.dtype)

    # ---- conv2: 3x3 conv, dilation d, padding d — 9 accumulated tap matmuls -------
    # Tap (ky,kx) reads the flat scratch at static offset (ky-1)*d*W + (kx-1)*d.
    # Vertical out-of-image reads land in the zero halo; horizontal wrap-around reads
    # (which would hit the adjacent row) are zeroed by the per-column masks.
    mask_l = mask_ref[0:1, :]   # neighbour at x - d is inside the image
    mask_r = mask_ref[1:2, :]   # neighbour at x + d is inside the image
    acc = jnp.zeros((Cmid, HW), jnp.float32)
    for ky in range(3):
        for kx in range(3):
            start = pad + (ky - 1) * d * W + (kx - 1) * d   # static Python int
            v = h1p_ref[:, start:start + HW]
            if kx == 0:
                v = v * mask_l
            elif kx == 2:
                v = v * mask_r
            acc = acc + jnp.dot(w2_ref[ky * 3 + kx], v,
                                preferred_element_type=jnp.float32)
    h2 = _prelu(acc + b2_ref[...], a2)

    # ---- conv3: 1x1 conv + BN bias (Dropout2d = eval-mode identity) ---------------
    h3 = jnp.dot(w3_ref[...], h2.astype(jnp.bfloat16),
                 preferred_element_type=jnp.float32) + b3_ref[...]

    # ---- residual add + final PReLU (lane-dense store, minor dim = H*W) -----------
    out_ref[0] = _prelu(h3 + x2_ref[0], a3)


def bottleneck_pallas(x1_nchw, x2_nchw, fp, *, dilation=1):
    """fp: folded params from fold_params().  Inputs/outputs are PyTorch-style NCHW."""
    N, Cin, H, W = x1_nchw.shape
    Cout = x2_nchw.shape[1]
    HW = H * W
    d = dilation

    # NCHW is already channel-major / spatial-minor: flattening (H, W) -> H*W is a free
    # reshape, so no boundary transposes are needed and the kernel's lane dim is H*W.
    x1 = x1_nchw.reshape(N, Cin, HW).astype(jnp.bfloat16)
    x2 = x2_nchw.reshape(N, Cout, HW).astype(jnp.float32)

    w1t, w2t, w3t = fp["w1t"], fp["w2t"], fp["w3t"]
    b1, b2, b3 = fp["b1"], fp["b2"], fp["b3"]
    alphas = fp["alphas"]
    Cmid = w1t.shape[0]

    # Column-validity masks for the +/-d horizontal taps of the flattened spatial axis.
    xs = jnp.arange(HW, dtype=jnp.int32) % W
    masks = jnp.stack([(xs >= d), (xs < W - d)]).astype(jnp.bfloat16)   # (2, HW)

    # Flat zero halo, lane-tile aligned and large enough for the largest tap offset.
    pad = max(128, ((d * W + d + 127) // 128) * 128)

    def full_spec(shape):
        nd = len(shape)
        return pl.BlockSpec(shape, lambda n, _nd=nd: (0,) * _nd)

    flops = 2 * N * HW * (Cin * Cmid + 9 * Cmid * Cmid + Cmid * Cout)
    bytes_accessed = int(x1.size * 2 + x2.size * 4 + N * Cout * HW * 4
                         + (w1t.size + w2t.size + w3t.size + masks.size) * 2
                         + (b1.size + b2.size + b3.size) * 4)

    kernel = functools.partial(_bottleneck_kernel, dilation=d, width=W, pad=pad)

    out = pl.pallas_call(
        kernel,
        out_shape=jax.ShapeDtypeStruct((N, Cout, HW), jnp.float32),
        grid=(N,),
        in_specs=[
            pl.BlockSpec((1, Cin, HW), lambda n: (n, 0, 0)),
            pl.BlockSpec((1, Cout, HW), lambda n: (n, 0, 0)),
            full_spec((2, HW)),                                 # column masks
            full_spec((Cmid, Cin)),                             # conv1 weight^T
            full_spec((9, Cmid, Cmid)),                         # conv2 tap weights^T
            full_spec((Cout, Cmid)),                            # conv3 weight^T
            full_spec((Cmid, 1)),                               # BN1 bias
            full_spec((Cmid, 1)),                               # BN2 bias
            full_spec((Cout, 1)),                               # BN3 bias
            pl.BlockSpec(memory_space=pltpu.MemorySpace.SMEM),  # PReLU slopes
        ],
        out_specs=pl.BlockSpec((1, Cout, HW), lambda n: (n, 0, 0)),
        scratch_shapes=[pltpu.VMEM((Cmid, pad + HW + pad), jnp.bfloat16)],
        compiler_params=pltpu.CompilerParams(dimension_semantics=("parallel",)),
        cost_estimate=pl.CostEstimate(flops=flops, transcendentals=0,
                                      bytes_accessed=bytes_accessed),
    )(x1, x2, masks, w1t, w2t, w3t, b1, b2, b3, alphas)

    # Free reshape back to PyTorch NCHW (no transpose).
    return out.reshape(N, Cout, H, W)


def init_params(key, Cin, Cmid, Cout):
    ks = jax.random.split(key, 16)

    def bn_fold(kg, kb, km, kv, C):
        gamma = 1.0 + 0.1 * jax.random.normal(kg, (C,), jnp.float32)
        beta = 0.1 * jax.random.normal(kb, (C,), jnp.float32)
        mean = 0.1 * jax.random.normal(km, (C,), jnp.float32)
        var = jnp.abs(jax.random.normal(kv, (C,), jnp.float32)) + 0.5
        eps = 1e-5
        scale = gamma / jnp.sqrt(var + eps)
        bias = beta - mean * scale
        return scale.reshape(1, C), bias.reshape(1, C)

    s1, b1 = bn_fold(ks[3], ks[4], ks[5], ks[6], Cmid)
    s2, b2 = bn_fold(ks[7], ks[8], ks[9], ks[10], Cmid)
    s3, b3 = bn_fold(ks[11], ks[12], ks[13], ks[14], Cout)

    return {
        "w1": jax.random.normal(ks[0], (Cin, Cmid), jnp.float32) / jnp.sqrt(Cin),
        "w2": jax.random.normal(ks[1], (9, Cmid, Cmid), jnp.float32) / jnp.sqrt(9.0 * Cmid),
        "w3": jax.random.normal(ks[2], (Cmid, Cout), jnp.float32) / jnp.sqrt(Cmid),
        "s1": s1, "b1": b1, "s2": s2, "b2": b2, "s3": s3, "b3": b3,
        # Distinct PReLU slopes to make the test stricter (nn.PReLU default is 0.25
        # everywhere; a real checkpoint would supply its learned slopes here).
        "alphas": jnp.array([0.25, 0.2, 0.3], jnp.float32),
    }


def fold_params(p):
    """Fold BN scales into the conv weights, transpose them to the kernel's
    channel-major layout and cast to bf16 for the MXU; biases stay f32."""
    w1t = (p["w1"] * p["s1"]).T.astype(jnp.bfloat16)                     # (Cmid, Cin)
    w2t = jnp.transpose(p["w2"] * p["s2"].reshape(1, 1, -1),
                        (0, 2, 1)).astype(jnp.bfloat16)                  # (9, Cout=Cmid, Cin=Cmid)
    w3t = (p["w3"] * p["s3"]).T.astype(jnp.bfloat16)                     # (Cout, Cmid)
    return {
        "w1t": w1t, "w2t": w2t, "w3t": w3t,
        "b1": p["b1"].reshape(-1, 1).astype(jnp.float32),
        "b2": p["b2"].reshape(-1, 1).astype(jnp.float32),
        "b3": p["b3"].reshape(-1, 1).astype(jnp.float32),
        "alphas": p["alphas"].astype(jnp.float32),
    }


def bottleneck_ref(x1_nchw, x2_nchw, fp, *, dilation=1):
    """Pure-JAX reference (lax.conv) on the same folded bf16 weights / f32 biases."""
    d = dilation
    a = fp["alphas"]
    x1 = x1_nchw.astype(jnp.bfloat16)
    x2 = x2_nchw.astype(jnp.float32)

    b1 = fp["b1"].reshape(1, -1, 1, 1)
    b2 = fp["b2"].reshape(1, -1, 1, 1)
    b3 = fp["b3"].reshape(1, -1, 1, 1)

    h1 = jnp.einsum("nchw,dc->ndhw", x1, fp["w1t"],
                    preferred_element_type=jnp.float32) + b1
    h1 = jnp.where(h1 > 0, h1, a[0] * h1)

    Cmid = fp["w1t"].shape[0]
    k = fp["w2t"].reshape(3, 3, Cmid, Cmid)           # (ky, kx, cout, cin)
    k = jnp.transpose(k, (2, 3, 0, 1))                # OIHW
    h2 = lax.conv_general_dilated(h1.astype(jnp.bfloat16), k,
                                  window_strides=(1, 1),
                                  padding=((d, d), (d, d)),
                                  rhs_dilation=(d, d),
                                  dimension_numbers=("NCHW", "OIHW", "NCHW"),
                                  preferred_element_type=jnp.float32) + b2
    h2 = jnp.where(h2 > 0, h2, a[1] * h2)

    h3 = jnp.einsum("nchw,dc->ndhw", h2.astype(jnp.bfloat16), fp["w3t"],
                    preferred_element_type=jnp.float32) + b3
    y = h3 + x2
    return jnp.where(y > 0, y, a[2] * y)


if __name__ == "__main__":
    N, Cin, Cmid, Cout, H, W = 2, 8, 4, 8, 16, 16

    key = jax.random.PRNGKey(0)
    kx1, kx2, kp = jax.random.split(key, 3)
    x1 = jax.random.normal(kx1, (N, Cin, H, W), jnp.float32)   # conv1 input (NCHW)
    x2 = jax.random.normal(kx2, (N, Cout, H, W), jnp.float32)  # residual branch (NCHW)
    params = init_params(kp, Cin, Cmid, Cout)
    folded = fold_params(params)

    for dilation in (1, 2):
        out = bottleneck_pallas(x1, x2, folded, dilation=dilation)
        out = jax.block_until_ready(out)

        ref = bottleneck_ref(x1, x2, folded, dilation=dilation)
        assert out.shape == (N, Cout, H, W), out.shape
        max_err = float(jnp.max(jnp.abs(out - ref)))
        assert max_err < 1e-2, (
            f"mismatch vs reference (dilation={dilation}), max abs err = {max_err}")

    print("KERNEL_OK")
</pallas_src>

<mosaic_0001>
module attributes {stable_mosaic.version = 11 : i64} {
  func.func @_bottleneck_kernel(%arg0: i32, %arg1: memref<1x8x256xbf16, #tpu.memory_space<vmem>>, %arg2: memref<1x8x256xf32, #tpu.memory_space<vmem>>, %arg3: memref<2x256xbf16, #tpu.memory_space<vmem>>, %arg4: memref<4x8xbf16, #tpu.memory_space<vmem>>, %arg5: memref<9x4x4xbf16, #tpu.memory_space<vmem>>, %arg6: memref<8x4xbf16, #tpu.memory_space<vmem>>, %arg7: memref<4x1xf32, #tpu.memory_space<vmem>>, %arg8: memref<4x1xf32, #tpu.memory_space<vmem>>, %arg9: memref<8x1xf32, #tpu.memory_space<vmem>>, %arg10: memref<3xf32, #tpu.memory_space<smem>>, %arg11: memref<1x8x256xf32, #tpu.memory_space<vmem>>, %arg12: memref<4x512xbf16, #tpu.memory_space<vmem>>) attributes {dimension_semantics = [#tpu.dimension_semantics<parallel>], iteration_bounds = array<i64: 2>, scalar_prefetch = 0 : i64, scratch_operands = 1 : i64, tpu.core_type = #tpu.core_type<tc>, window_params = [{transform_indices = @transform_0, window_bounds = array<i64: 1, 8, 256>}, {transform_indices = @transform_1, window_bounds = array<i64: 1, 8, 256>}, {pipeline_mode = #tpu.pipeline_mode<synchronous>, transform_indices = @transform_2, window_bounds = array<i64: 2, 256>}, {pipeline_mode = #tpu.pipeline_mode<synchronous>, transform_indices = @transform_3, window_bounds = array<i64: 4, 8>}, {pipeline_mode = #tpu.pipeline_mode<synchronous>, transform_indices = @transform_4, window_bounds = array<i64: 9, 4, 4>}, {pipeline_mode = #tpu.pipeline_mode<synchronous>, transform_indices = @transform_5, window_bounds = array<i64: 8, 4>}, {pipeline_mode = #tpu.pipeline_mode<synchronous>, transform_indices = @transform_6, window_bounds = array<i64: 4, 1>}, {pipeline_mode = #tpu.pipeline_mode<synchronous>, transform_indices = @transform_7, window_bounds = array<i64: 4, 1>}, {pipeline_mode = #tpu.pipeline_mode<synchronous>, transform_indices = @transform_8, window_bounds = array<i64: 8, 1>}, {transform_indices = @transform_9, window_bounds = array<i64: 3>}, {transform_indices = @transform_10, window_bounds = array<i64: 1, 8, 256>}]} {
    %c0 = arith.constant 0 : index
    %0 = memref.load %arg10[%c0] : memref<3xf32, #tpu.memory_space<smem>>
    %c1 = arith.constant 1 : index
    %1 = memref.load %arg10[%c1] : memref<3xf32, #tpu.memory_space<smem>>
    %c2 = arith.constant 2 : index
    %2 = memref.load %arg10[%c2] : memref<3xf32, #tpu.memory_space<smem>>
    %c0_0 = arith.constant 0 : index
    %c0_1 = arith.constant 0 : index
    %3 = vector.load %arg4[%c0_0, %c0_1] : memref<4x8xbf16, #tpu.memory_space<vmem>>, vector<4x8xbf16>
    %c0_2 = arith.constant 0 : index
    %c0_3 = arith.constant 0 : index
    %c0_4 = arith.constant 0 : index
    %4 = vector.load %arg1[%c0_2, %c0_3, %c0_4] : memref<1x8x256xbf16, #tpu.memory_space<vmem>>, vector<1x8x256xbf16>
    %5 = vector.shape_cast %4 : vector<1x8x256xbf16> to vector<8x256xbf16>
    %cst = arith.constant dense<0.000000e+00> : vector<4x256xf32>
    %6 = tpu.matmul %3, %5, %cst {dimension_numbers = #tpu.dot_dimension_numbers<[1], [0], [0], [1], [0, 0, 1, 1], [], []>} : vector<4x8xbf16>, vector<8x256xbf16>, vector<4x256xf32> -> vector<4x256xf32>
    %c0_5 = arith.constant 0 : index
    %c0_6 = arith.constant 0 : index
    %7 = vector.load %arg7[%c0_5, %c0_6] : memref<4x1xf32, #tpu.memory_space<vmem>>, vector<4x1xf32>
    %8 = vector.broadcast %7 : vector<4x1xf32> to vector<4x256xf32>
    %9 = arith.addf %6, %8 : vector<4x256xf32>
    %cst_7 = arith.constant 0.000000e+00 : f32
    %10 = vector.broadcast %cst_7 : f32 to vector<4x256xf32>
    %11 = arith.cmpf ogt, %9, %10 : vector<4x256xf32>
    %12 = vector.broadcast %0 : f32 to vector<4x256xf32>
    %13 = arith.mulf %12, %9 : vector<4x256xf32>
    %14 = arith.select %11, %9, %13 : vector<4x256xi1>, vector<4x256xf32>
    %cst_8 = arith.constant 0.000000e+00 : bf16
    %15 = vector.broadcast %cst_8 : bf16 to vector<4x128xbf16>
    %c0_9 = arith.constant 0 : index
    %c0_10 = arith.constant 0 : index
    %16 = vector.load %arg12[%c0_9, %c0_10] : memref<4x512xbf16, #tpu.memory_space<vmem>>, vector<4x128xbf16>
    tpu.vector_store %arg12[%c0_9, %c0_10], %15 {strides = array<i32>} : memref<4x512xbf16, #tpu.memory_space<vmem>>, vector<4x128xbf16>,
    %c0_11 = arith.constant 0 : index
    %c384 = arith.constant 384 : index
    %17 = vector.load %arg12[%c0_11, %c384] : memref<4x512xbf16, #tpu.memory_space<vmem>>, vector<4x128xbf16>
    tpu.vector_store %arg12[%c0_11, %c384], %15 {strides = array<i32>} : memref<4x512xbf16, #tpu.memory_space<vmem>>, vector<4x128xbf16>,
    %18 = arith.truncf %14 : vector<4x256xf32> to vector<4x256xbf16>
    %c0_12 = arith.constant 0 : index
    %c128 = arith.constant 128 : index
    %19 = vector.load %arg12[%c0_12, %c128] : memref<4x512xbf16, #tpu.memory_space<vmem>>, vector<4x256xbf16>
    tpu.vector_store %arg12[%c0_12, %c128], %18 {strides = array<i32>} : memref<4x512xbf16, #tpu.memory_space<vmem>>, vector<4x256xbf16>,
    %c0_13 = arith.constant 0 : index
    %c0_14 = arith.constant 0 : index
    %20 = vector.load %arg3[%c0_13, %c0_14] : memref<2x256xbf16, #tpu.memory_space<vmem>>, vector<1x256xbf16>
    %c1_15 = arith.constant 1 : index
    %c0_16 = arith.constant 0 : index
    %21 = vector.load %arg3[%c1_15, %c0_16] : memref<2x256xbf16, #tpu.memory_space<vmem>>, vector<1x256xbf16>
    %cst_17 = arith.constant 0.000000e+00 : f32
    %22 = vector.broadcast %cst_17 : f32 to vector<4x256xf32>
    %c0_18 = arith.constant 0 : index
    %c111 = arith.constant 111 : index
    %23 = vector.load %arg12[%c0_18, %c111] : memref<4x512xbf16, #tpu.memory_space<vmem>>, vector<4x256xbf16>
    %24 = vector.broadcast %20 : vector<1x256xbf16> to vector<4x256xbf16>
    %25 = arith.mulf %23, %24 : vector<4x256xbf16>
    %c0_19 = arith.constant 0 : index
    %c0_20 = arith.constant 0 : index
    %c0_21 = arith.constant 0 : index
    %26 = vector.load %arg5[%c0_19, %c0_20, %c0_21] : memref<9x4x4xbf16, #tpu.memory_space<vmem>>, vector<1x4x4xbf16>
    %27 = vector.shape_cast %26 : vector<1x4x4xbf16> to vector<4x4xbf16>
    %cst_22 = arith.constant dense<0.000000e+00> : vector<4x256xf32>
    %28 = tpu.matmul %27, %25, %cst_22 {dimension_numbers = #tpu.dot_dimension_numbers<[1], [0], [0], [1], [0, 0, 1, 1], [], []>} : vector<4x4xbf16>, vector<4x256xbf16>, vector<4x256xf32> -> vector<4x256xf32>
    %29 = arith.addf %22, %28 : vector<4x256xf32>
    %c0_23 = arith.constant 0 : index
    %c112 = arith.constant 112 : index
    %30 = vector.load %arg12[%c0_23, %c112] : memref<4x512xbf16, #tpu.memory_space<vmem>>, vector<4x256xbf16>
    %c1_24 = arith.constant 1 : index
    %c0_25 = arith.constant 0 : index
    %c0_26 = arith.constant 0 : index
    %31 = vector.load %arg5[%c1_24, %c0_25, %c0_26] : memref<9x4x4xbf16, #tpu.memory_space<vmem>>, vector<1x4x4xbf16>
    %32 = vector.shape_cast %31 : vector<1x4x4xbf16> to vector<4x4xbf16>
    %cst_27 = arith.constant dense<0.000000e+00> : vector<4x256xf32>
    %33 = tpu.matmul %32, %30, %cst_27 {dimension_numbers = #tpu.dot_dimension_numbers<[1], [0], [0], [1], [0, 0, 1, 1], [], []>} : vector<4x4xbf16>, vector<4x256xbf16>, vector<4x256xf32> -> vector<4x256xf32>
    %34 = arith.addf %29, %33 : vector<4x256xf32>
    %c0_28 = arith.constant 0 : index
    %c113 = arith.constant 113 : index
    %35 = vector.load %arg12[%c0_28, %c113] : memref<4x512xbf16, #tpu.memory_space<vmem>>, vector<4x256xbf16>
    %36 = vector.broadcast %21 : vector<1x256xbf16> to vector<4x256xbf16>
    %37 = arith.mulf %35, %36 : vector<4x256xbf16>
    %c2_29 = arith.constant 2 : index
    %c0_30 = arith.constant 0 : index
    %c0_31 = arith.constant 0 : index
    %38 = vector.load %arg5[%c2_29, %c0_30, %c0_31] : memref<9x4x4xbf16, #tpu.memory_space<vmem>>, vector<1x4x4xbf16>
    %39 = vector.shape_cast %38 : vector<1x4x4xbf16> to vector<4x4xbf16>
    %cst_32 = arith.constant dense<0.000000e+00> : vector<4x256xf32>
    %40 = tpu.matmul %39, %37, %cst_32 {dimension_numbers = #tpu.dot_dimension_numbers<[1], [0], [0], [1], [0, 0, 1, 1], [], []>} : vector<4x4xbf16>, vector<4x256xbf16>, vector<4x256xf32> -> vector<4x256xf32>
    %41 = arith.addf %34, %40 : vector<4x256xf32>
    %c0_33 = arith.constant 0 : index
    %c127 = arith.constant 127 : index
    %42 = vector.load %arg12[%c0_33, %c127] : memref<4x512xbf16, #tpu.memory_space<vmem>>, vector<4x256xbf16>
    %43 = vector.broadcast %20 : vector<1x256xbf16> to vector<4x256xbf16>
    %44 = arith.mulf %42, %43 : vector<4x256xbf16>
    %c3 = arith.constant 3 : index
    %c0_34 = arith.constant 0 : index
    %c0_35 = arith.constant 0 : index
    %45 = vector.load %arg5[%c3, %c0_34, %c0_35] : memref<9x4x4xbf16, #tpu.memory_space<vmem>>, vector<1x4x4xbf16>
    %46 = vector.shape_cast %45 : vector<1x4x4xbf16> to vector<4x4xbf16>
    %cst_36 = arith.constant dense<0.000000e+00> : vector<4x256xf32>
    %47 = tpu.matmul %46, %44, %cst_36 {dimension_numbers = #tpu.dot_dimension_numbers<[1], [0], [0], [1], [0, 0, 1, 1], [], []>} : vector<4x4xbf16>, vector<4x256xbf16>, vector<4x256xf32> -> vector<4x256xf32>
    %48 = arith.addf %41, %47 : vector<4x256xf32>
    %c0_37 = arith.constant 0 : index
    %c128_38 = arith.constant 128 : index
    %49 = vector.load %arg12[%c0_37, %c128_38] : memref<4x512xbf16, #tpu.memory_space<vmem>>, vector<4x256xbf16>
    %c4 = arith.constant 4 : index
    %c0_39 = arith.constant 0 : index
    %c0_40 = arith.constant 0 : index
    %50 = vector.load %arg5[%c4, %c0_39, %c0_40] : memref<9x4x4xbf16, #tpu.memory_space<vmem>>, vector<1x4x4xbf16>
    %51 = vector.shape_cast %50 : vector<1x4x4xbf16> to vector<4x4xbf16>
    %cst_41 = arith.constant dense<0.000000e+00> : vector<4x256xf32>
    %52 = tpu.matmul %51, %49, %cst_41 {dimension_numbers = #tpu.dot_dimension_numbers<[1], [0], [0], [1], [0, 0, 1, 1], [], []>} : vector<4x4xbf16>, vector<4x256xbf16>, vector<4x256xf32> -> vector<4x256xf32>
    %53 = arith.addf %48, %52 : vector<4x256xf32>
    %c0_42 = arith.constant 0 : index
    %c129 = arith.constant 129 : index
    %54 = vector.load %arg12[%c0_42, %c129] : memref<4x512xbf16, #tpu.memory_space<vmem>>, vector<4x256xbf16>
    %55 = vector.broadcast %21 : vector<1x256xbf16> to vector<4x256xbf16>
    %56 = arith.mulf %54, %55 : vector<4x256xbf16>
    %c5 = arith.constant 5 : index
    %c0_43 = arith.constant 0 : index
    %c0_44 = arith.constant 0 : index
    %57 = vector.load %arg5[%c5, %c0_43, %c0_44] : memref<9x4x4xbf16, #tpu.memory_space<vmem>>, vector<1x4x4xbf16>
    %58 = vector.shape_cast %57 : vector<1x4x4xbf16> to vector<4x4xbf16>
    %cst_45 = arith.constant dense<0.000000e+00> : vector<4x256xf32>
    %59 = tpu.matmul %58, %56, %cst_45 {dimension_numbers = #tpu.dot_dimension_numbers<[1], [0], [0], [1], [0, 0, 1, 1], [], []>} : vector<4x4xbf16>, vector<4x256xbf16>, vector<4x256xf32> -> vector<4x256xf32>
    %60 = arith.addf %53, %59 : vector<4x256xf32>
    %c0_46 = arith.constant 0 : index
    %c143 = arith.constant 143 : index
    %61 = vector.load %arg12[%c0_46, %c143] : memref<4x512xbf16, #tpu.memory_space<vmem>>, vector<4x256xbf16>
    %62 = vector.broadcast %20 : vector<1x256xbf16> to vector<4x256xbf16>
    %63 = arith.mulf %61, %62 : vector<4x256xbf16>
    %c6 = arith.constant 6 : index
    %c0_47 = arith.constant 0 : index
    %c0_48 = arith.constant 0 : index
    %64 = vector.load %arg5[%c6, %c0_47, %c0_48] : memref<9x4x4xbf16, #tpu.memory_space<vmem>>, vector<1x4x4xbf16>
    %65 = vector.shape_cast %64 : vector<1x4x4xbf16> to vector<4x4xbf16>
    %cst_49 = arith.constant dense<0.000000e+00> : vector<4x256xf32>
    %66 = tpu.matmul %65, %63, %cst_49 {dimension_numbers = #tpu.dot_dimension_numbers<[1], [0], [0], [1], [0, 0, 1, 1], [], []>} : vector<4x4xbf16>, vector<4x256xbf16>, vector<4x256xf32> -> vector<4x256xf32>
    %67 = arith.addf %60, %66 : vector<4x256xf32>
    %c0_50 = arith.constant 0 : index
    %c144 = arith.constant 144 : index
    %68 = vector.load %arg12[%c0_50, %c144] : memref<4x512xbf16, #tpu.memory_space<vmem>>, vector<4x256xbf16>
    %c7 = arith.constant 7 : index
    %c0_51 = arith.constant 0 : index
    %c0_52 = arith.constant 0 : index
    %69 = vector.load %arg5[%c7, %c0_51, %c0_52] : memref<9x4x4xbf16, #tpu.memory_space<vmem>>, vector<1x4x4xbf16>
    %70 = vector.shape_cast %69 : vector<1x4x4xbf16> to vector<4x4xbf16>
    %cst_53 = arith.constant dense<0.000000e+00> : vector<4x256xf32>
    %71 = tpu.matmul %70, %68, %cst_53 {dimension_numbers = #tpu.dot_dimension_numbers<[1], [0], [0], [1], [0, 0, 1, 1], [], []>} : vector<4x4xbf16>, vector<4x256xbf16>, vector<4x256xf32> -> vector<4x256xf32>
    %72 = arith.addf %67, %71 : vector<4x256xf32>
    %c0_54 = arith.constant 0 : index
    %c145 = arith.constant 145 : index
    %73 = vector.load %arg12[%c0_54, %c145] : memref<4x512xbf16, #tpu.memory_space<vmem>>, vector<4x256xbf16>
    %74 = vector.broadcast %21 : vector<1x256xbf16> to vector<4x256xbf16>
    %75 = arith.mulf %73, %74 : vector<4x256xbf16>
    %c8 = arith.constant 8 : index
    %c0_55 = arith.constant 0 : index
    %c0_56 = arith.constant 0 : index
    %76 = vector.load %arg5[%c8, %c0_55, %c0_56] : memref<9x4x4xbf16, #tpu.memory_space<vmem>>, vector<1x4x4xbf16>
    %77 = vector.shape_cast %76 : vector<1x4x4xbf16> to vector<4x4xbf16>
    %cst_57 = arith.constant dense<0.000000e+00> : vector<4x256xf32>
    %78 = tpu.matmul %77, %75, %cst_57 {dimension_numbers = #tpu.dot_dimension_numbers<[1], [0], [0], [1], [0, 0, 1, 1], [], []>} : vector<4x4xbf16>, vector<4x256xbf16>, vector<4x256xf32> -> vector<4x256xf32>
    %79 = arith.addf %72, %78 : vector<4x256xf32>
    %c0_58 = arith.constant 0 : index
    %c0_59 = arith.constant 0 : index
    %80 = vector.load %arg8[%c0_58, %c0_59] : memref<4x1xf32, #tpu.memory_space<vmem>>, vector<4x1xf32>
    %81 = vector.broadcast %80 : vector<4x1xf32> to vector<4x256xf32>
    %82 = arith.addf %79, %81 : vector<4x256xf32>
    %cst_60 = arith.constant 0.000000e+00 : f32
    %83 = vector.broadcast %cst_60 : f32 to vector<4x256xf32>
    %84 = arith.cmpf ogt, %82, %83 : vector<4x256xf32>
    %85 = vector.broadcast %1 : f32 to vector<4x256xf32>
    %86 = arith.mulf %85, %82 : vector<4x256xf32>
    %87 = arith.select %84, %82, %86 : vector<4x256xi1>, vector<4x256xf32>
    %c0_61 = arith.constant 0 : index
    %c0_62 = arith.constant 0 : index
    %88 = vector.load %arg6[%c0_61, %c0_62] : memref<8x4xbf16, #tpu.memory_space<vmem>>, vector<8x4xbf16>
    %89 = arith.truncf %87 : vector<4x256xf32> to vector<4x256xbf16>
    %cst_63 = arith.constant dense<0.000000e+00> : vector<8x256xf32>
    %90 = tpu.matmul %88, %89, %cst_63 {dimension_numbers = #tpu.dot_dimension_numbers<[1], [0], [0], [1], [0, 0, 1, 1], [], []>} : vector<8x4xbf16>, vector<4x256xbf16>, vector<8x256xf32> -> vector<8x256xf32>
    %c0_64 = arith.constant 0 : index
    %c0_65 = arith.constant 0 : index
    %91 = vector.load %arg9[%c0_64, %c0_65] : memref<8x1xf32, #tpu.memory_space<vmem>>, vector<8x1xf32>
    %92 = vector.broadcast %91 : vector<8x1xf32> to vector<8x256xf32>
    %93 = arith.addf %90, %92 : vector<8x256xf32>
    %c0_66 = arith.constant 0 : index
    %c0_67 = arith.constant 0 : index
    %c0_68 = arith.constant 0 : index
    %94 = vector.load %arg2[%c0_66, %c0_67, %c0_68] : memref<1x8x256xf32, #tpu.memory_space<vmem>>, vector<1x8x256xf32>
    %95 = vector.shape_cast %94 : vector<1x8x256xf32> to vector<8x256xf32>
    %96 = arith.addf %93, %95 : vector<8x256xf32>
    %cst_69 = arith.constant 0.000000e+00 : f32
    %97 = vector.broadcast %cst_69 : f32 to vector<8x256xf32>
    %98 = arith.cmpf ogt, %96, %97 : vector<8x256xf32>
    %99 = vector.broadcast %2 : f32 to vector<8x256xf32>
    %100 = arith.mulf %99, %96 : vector<8x256xf32>
    %101 = arith.select %98, %96, %100 : vector<8x256xi1>, vector<8x256xf32>
    %c0_70 = arith.constant 0 : index
    %c0_71 = arith.constant 0 : index
    %c0_72 = arith.constant 0 : index
    %102 = vector.load %arg11[%c0_70, %c0_71, %c0_72] : memref<1x8x256xf32, #tpu.memory_space<vmem>>, vector<1x8x256xf32>
    %103 = vector.shape_cast %102 : vector<1x8x256xf32> to vector<8x256xf32>
    %104 = vector.shape_cast %101 : vector<8x256xf32> to vector<1x8x256xf32>
    tpu.vector_store %arg11[%c0_70, %c0_71, %c0_72], %104 {strides = array<i32>} : memref<1x8x256xf32, #tpu.memory_space<vmem>>, vector<1x8x256xf32>,
    return
  }
  func.func @transform_0(%arg0: i32) -> (i32, i32, i32) {
    %c0_i32 = arith.constant 0 : i32
    %c0_i32_0 = arith.constant 0 : i32
    %c0_i32_1 = arith.constant 0 : i32
    return %arg0, %c0_i32, %c0_i32_0 : i32, i32, i32
  }
  func.func @transform_1(%arg0: i32) -> (i32, i32, i32) {
    %c0_i32 = arith.constant 0 : i32
    %c0_i32_0 = arith.constant 0 : i32
    %c0_i32_1 = arith.constant 0 : i32
    return %arg0, %c0_i32, %c0_i32_0 : i32, i32, i32
  }
  func.func @transform_2(%arg0: i32) -> (i32, i32) {
    %c0_i32 = arith.constant 0 : i32
    %c0_i32_0 = arith.constant 0 : i32
    %c0_i32_1 = arith.constant 0 : i32
    return %c0_i32, %c0_i32_0 : i32, i32
  }
  func.func @transform_3(%arg0: i32) -> (i32, i32) {
    %c0_i32 = arith.constant 0 : i32
    %c0_i32_0 = arith.constant 0 : i32
    %c0_i32_1 = arith.constant 0 : i32
    return %c0_i32, %c0_i32_0 : i32, i32
  }
  func.func @transform_4(%arg0: i32) -> (i32, i32, i32) {
    %c0_i32 = arith.constant 0 : i32
    %c0_i32_0 = arith.constant 0 : i32
    %c0_i32_1 = arith.constant 0 : i32
    %c0_i32_2 = arith.constant 0 : i32
    return %c0_i32, %c0_i32_0, %c0_i32_1 : i32, i32, i32
  }
  func.func @transform_5(%arg0: i32) -> (i32, i32) {
    %c0_i32 = arith.constant 0 : i32
    %c0_i32_0 = arith.constant 0 : i32
    %c0_i32_1 = arith.constant 0 : i32
    return %c0_i32, %c0_i32_0 : i32, i32
  }
  func.func @transform_6(%arg0: i32) -> (i32, i32) {
    %c0_i32 = arith.constant 0 : i32
    %c0_i32_0 = arith.constant 0 : i32
    %c0_i32_1 = arith.constant 0 : i32
    return %c0_i32, %c0_i32_0 : i32, i32
  }
  func.func @transform_7(%arg0: i32) -> (i32, i32) {
    %c0_i32 = arith.constant 0 : i32
    %c0_i32_0 = arith.constant 0 : i32
    %c0_i32_1 = arith.constant 0 : i32
    return %c0_i32, %c0_i32_0 : i32, i32
  }
  func.func @transform_8(%arg0: i32) -> (i32, i32) {
    %c0_i32 = arith.constant 0 : i32
    %c0_i32_0 = arith.constant 0 : i32
    %c0_i32_1 = arith.constant 0 : i32
    return %c0_i32, %c0_i32_0 : i32, i32
  }
  func.func @transform_9(%arg0: i32) -> i32 {
    %c0_i32 = arith.constant 0 : i32
    %c0_i32_0 = arith.constant 0 : i32
    return %c0_i32 : i32
  }
  func.func @transform_10(%arg0: i32) -> (i32, i32, i32) {
    %c0_i32 = arith.constant 0 : i32
    %c0_i32_0 = arith.constant 0 : i32
    %c0_i32_1 = arith.constant 0 : i32
    return %arg0, %c0_i32, %c0_i32_0 : i32, i32, i32
  }
}

</mosaic_0001>

<llo_original>
// kernel: tpu_custom_call.1
$region0: #{tpu_custom_call.1}
  #allocation0 [shape = 'u32[]', space=smem, size = 0x4, offset = 0x4, fixed_abs, tag = 'smem constant byte address 0x4 - core index']
  #allocation1 [shape = 'u32[144,128]{1,0:T(1,128)}', space=vmem, size = 0x12000, scoped, tag = 'internal scratch']
  #allocation2 [shape = 'bf16[4,512]{1,0:T(4,128)(2,1)}', space=vmem, size = 0x1000, scoped, tag = 'scratch operand']
  %s0 = inlined_call_operand.vmem [shape: bf16[2,8,256], index: 0, kind: input, shape index: {}]
  %s1 = inlined_call_operand.vmem [shape: f32[2,8,256], index: 1, kind: input, shape index: {}]
  %s2 = inlined_call_operand.vmem [shape: bf16[2,256], index: 2, kind: input, shape index: {}]
  %s3 = inlined_call_operand.vmem [shape: bf16[4,8], index: 3, kind: input, shape index: {}]
  %s4 = inlined_call_operand.vmem [shape: bf16[9,4,4], index: 4, kind: input, shape index: {}]
  %s5 = inlined_call_operand.vmem [shape: bf16[8,4], index: 5, kind: input, shape index: {}]
  %s6 = inlined_call_operand.vmem [shape: f32[4,1], index: 6, kind: input, shape index: {}]
  %s7 = inlined_call_operand.vmem [shape: f32[4,1], index: 7, kind: input, shape index: {}]
  %s8 = inlined_call_operand.vmem [shape: f32[8,1], index: 8, kind: input, shape index: {}]
  %s9 = inlined_call_operand.vmem [shape: f32[3], index: 9, kind: input, shape index: {}]
  %s10 = inlined_call_operand.hbm [shape: f32[2,8,256], index: 10, kind: output, shape index: {}]
  %s11 = sld [smem:[#allocation0]]
  $region77: #{tpu_custom_call.1} parent=0
    _
  %s13 = ssub.s32 1, %s11
  %s14 = scalar_select 0, %s13, %s11
  $region1: #{tpu_custom_call.1} parent=0
    #allocation3 [shape = 'u8[512]{0}', space=smem, size = 0x200, scoped, tag = 'input window, operand 9, single buffered']
    #allocation4 [shape = 's32[2]{0}', space=sflag, size = 0x8, scoped, tag = 'scoped memory for tpu_custom_call.1']
    #allocation5 [shape = 's32[2]{0}', space=sflag, size = 0x8, scoped, tag = 'scoped memory for tpu_custom_call.1']
    #allocation6 [shape = 'u8[16384]{0}', space=vmem, size = 0x4000, scoped, tag = 'output window, operand 0']
    %15 = vsyncpa [#allocation5], 0
    %16 = vsyncpa [#allocation4], 0
    %s17 = scalar_lea.sflag [#allocation4], 1
    %18 = vsyncpa %s17, 0
    loop: start=0, step=1, limit=4
    $region2: #{tpu_custom_call.1} parent=1 // loop_pre_header
      _
    $region3: #{tpu_custom_call.1} parent=1 // loop_header
      %s20 = sphi 0, %s24
      %p21 = scmp.ge.s32.totalorder %s20, 4
      %s30 = sphi 0, %s32
      %s33 = sphi 0, %s30
      %s34 = sphi 0, %s33
      %s50 = sphi 0, %s34
      %s56 = sphi 0, %s58
      %s59 = sphi 0, %s56
      %s60 = sphi 0, %s59
      %s76 = sphi 0, %s60
      %s80 = sphi 0, %s80
      %s82 = sphi 0, %s80
      %s83 = sphi 0, %s82
      %s97 = sphi 0, %s83
      %s101 = sphi 0, %s101
      %s103 = sphi 0, %s101
      %s104 = sphi 0, %s103
      %s118 = sphi 0, %s104
      %s122 = sphi 0, %s122
      %s124 = sphi 0, %s122
      %s125 = sphi 0, %s124
      %s139 = sphi 0, %s125
      %s143 = sphi 0, %s143
      %s145 = sphi 0, %s143
      %s146 = sphi 0, %s145
      %s160 = sphi 0, %s146
      %s164 = sphi 0, %s164
      %s166 = sphi 0, %s164
      %s167 = sphi 0, %s166
      %s181 = sphi 0, %s167
      %s185 = sphi 0, %s185
      %s187 = sphi 0, %s185
      %s188 = sphi 0, %s187
      %s202 = sphi 0, %s188
      %s206 = sphi 0, %s206
      %s208 = sphi 0, %s206
      %s209 = sphi 0, %s208
      %s223 = sphi 0, %s209
      %s227 = sphi 0, %s227
      %s229 = sphi 0, %s227
      %s230 = sphi 0, %s229
      %s244 = sphi 0, %s230
      %s250 = sphi 0, %s252
      %s253 = sphi 0, %s250
      %s254 = sphi 0, %s253
      %s270 = sphi 0, %s254
    $region4: #{tpu_custom_call.1} parent=1 // loop_header_branch
      %23 = sbr.rel (%p21) target = $region8
    $region5: #{tpu_custom_call.1} parent=1 // loop_body
      %s25 = ssub.s32 %s20, 1
      %s26 = ssub.s32 %s20, 2
      %s27 = sadd.s32 %s20, 1
      %s28 = ssub.s32 %s20, %s27
      %p29 = scmp.eq.s32.totalorder %s28, 0
      %s31 = sadd.s32 %s30, 1
      %s32 = scalar_select %p29, %s30, %s31
      %p35 = pneg %p29
      %p36 = scmp.eq.s32.totalorder %s20, 1
      %p37 = por %p35, %p36
      %p38 = scmp.ne.s32.totalorder %s30, %s33
      %p39 = scmp.eq.s32.totalorder %s20, 0
      %p40 = por %p38, %p39
      %p41 = scmp.ne.s32.totalorder %s30, %s33
      %p42 = scmp.eq.s32.totalorder %s25, 1
      %p43 = por %p41, %p42
      %p44 = scmp.ne.s32.totalorder %s33, %s34
      %p45 = scmp.eq.s32.totalorder %s25, 0
      %p46 = por %p44, %p45
      %p47 = scmp.ne.s32.totalorder %s33, %s34
      %p48 = scmp.eq.s32.totalorder %s26, 1
      %p49 = por %p47, %p48
      %p51 = scmp.ne.s32.totalorder %s34, %s50
      %p52 = scmp.eq.s32.totalorder %s26, 0
      %p53 = por %p51, %p52
      %s54 = ssub.s32 %s20, %s27
      %p55 = scmp.eq.s32.totalorder %s54, 0
      %s57 = sadd.s32 %s56, 1
      %s58 = scalar_select %p55, %s56, %s57
      %p61 = pneg %p55
      %p62 = scmp.eq.s32.totalorder %s20, 1
      %p63 = por %p61, %p62
      %p64 = scmp.ne.s32.totalorder %s56, %s59
      %p65 = scmp.eq.s32.totalorder %s20, 0
      %p66 = por %p64, %p65
      %p67 = scmp.ne.s32.totalorder %s56, %s59
      %p68 = scmp.eq.s32.totalorder %s25, 1
      %p69 = por %p67, %p68
      %p70 = scmp.ne.s32.totalorder %s59, %s60
      %p71 = scmp.eq.s32.totalorder %s25, 0
      %p72 = por %p70, %p71
      %p73 = scmp.ne.s32.totalorder %s59, %s60
      %p74 = scmp.eq.s32.totalorder %s26, 1
      %p75 = por %p73, %p74
      %p77 = scmp.ne.s32.totalorder %s60, %s76
      %p78 = scmp.eq.s32.totalorder %s26, 0
      %p79 = por %p77, %p78
      %s81 = sadd.s32 %s80, 1
      %p84 = scmp.eq.s32.totalorder %s20, 1
      %p85 = scmp.ne.s32.totalorder %s80, %s82
      %p86 = scmp.eq.s32.totalorder %s20, 0
      %p87 = por %p85, %p86
      %p88 = scmp.ne.s32.totalorder %s80, %s82
      %p89 = scmp.eq.s32.totalorder %s25, 1
      %p90 = por %p88, %p89
      %p91 = scmp.ne.s32.totalorder %s82, %s83
      %p92 = scmp.eq.s32.totalorder %s25, 0
      %p93 = por %p91, %p92
      %p94 = scmp.ne.s32.totalorder %s82, %s83
      %p95 = scmp.eq.s32.totalorder %s26, 1
      %p96 = por %p94, %p95
      %p98 = scmp.ne.s32.totalorder %s83, %s97
      %p99 = scmp.eq.s32.totalorder %s26, 0
      %p100 = por %p98, %p99
      %s102 = sadd.s32 %s101, 1
      %p105 = scmp.eq.s32.totalorder %s20, 1
      %p106 = scmp.ne.s32.totalorder %s101, %s103
      %p107 = scmp.eq.s32.totalorder %s20, 0
      %p108 = por %p106, %p107
      %p109 = scmp.ne.s32.totalorder %s101, %s103
      %p110 = scmp.eq.s32.totalorder %s25, 1
      %p111 = por %p109, %p110
      %p112 = scmp.ne.s32.totalorder %s103, %s104
      %p113 = scmp.eq.s32.totalorder %s25, 0
      %p114 = por %p112, %p113
      %p115 = scmp.ne.s32.totalorder %s103, %s104
      %p116 = scmp.eq.s32.totalorder %s26, 1
      %p117 = por %p115, %p116
      %p119 = scmp.ne.s32.totalorder %s104, %s118
      %p120 = scmp.eq.s32.totalorder %s26, 0
      %p121 = por %p119, %p120
      %s123 = sadd.s32 %s122, 1
      %p126 = scmp.eq.s32.totalorder %s20, 1
      %p127 = scmp.ne.s32.totalorder %s122, %s124
      %p128 = scmp.eq.s32.totalorder %s20, 0
      %p129 = por %p127, %p128
      %p130 = scmp.ne.s32.totalorder %s122, %s124
      %p131 = scmp.eq.s32.totalorder %s25, 1
      %p132 = por %p130, %p131
      %p133 = scmp.ne.s32.totalorder %s124, %s125
      %p134 = scmp.eq.s32.totalorder %s25, 0
      %p135 = por %p133, %p134
      %p136 = scmp.ne.s32.totalorder %s124, %s125
      %p137 = scmp.eq.s32.totalorder %s26, 1
      %p138 = por %p136, %p137
      %p140 = scmp.ne.s32.totalorder %s125, %s139
      %p141 = scmp.eq.s32.totalorder %s26, 0
      %p142 = por %p140, %p141
      %s144 = sadd.s32 %s143, 1
      %p147 = scmp.eq.s32.totalorder %s20, 1
      %p148 = scmp.ne.s32.totalorder %s143, %s145
      %p149 = scmp.eq.s32.totalorder %s20, 0
      %p150 = por %p148, %p149
      %p151 = scmp.ne.s32.totalorder %s143, %s145
      %p152 = scmp.eq.s32.totalorder %s25, 1
      %p153 = por %p151, %p152
      %p154 = scmp.ne.s32.totalorder %s145, %s146
      %p155 = scmp.eq.s32.totalorder %s25, 0
      %p156 = por %p154, %p155
      %p157 = scmp.ne.s32.totalorder %s145, %s146
      %p158 = scmp.eq.s32.totalorder %s26, 1
      %p159 = por %p157, %p158
      %p161 = scmp.ne.s32.totalorder %s146, %s160
      %p162 = scmp.eq.s32.totalorder %s26, 0
      %p163 = por %p161, %p162
      %s165 = sadd.s32 %s164, 1
      %p168 = scmp.eq.s32.totalorder %s20, 1
      %p169 = scmp.ne.s32.totalorder %s164, %s166
      %p170 = scmp.eq.s32.totalorder %s20, 0
      %p171 = por %p169, %p170
      %p172 = scmp.ne.s32.totalorder %s164, %s166
      %p173 = scmp.eq.s32.totalorder %s25, 1
      %p174 = por %p172, %p173
      %p175 = scmp.ne.s32.totalorder %s166, %s167
      %p176 = scmp.eq.s32.totalorder %s25, 0
      %p177 = por %p175, %p176
      %p178 = scmp.ne.s32.totalorder %s166, %s167
      %p179 = scmp.eq.s32.totalorder %s26, 1
      %p180 = por %p178, %p179
      %p182 = scmp.ne.s32.totalorder %s167, %s181
      %p183 = scmp.eq.s32.totalorder %s26, 0
      %p184 = por %p182, %p183
      %s186 = sadd.s32 %s185, 1
      %p189 = scmp.eq.s32.totalorder %s20, 1
      %p190 = scmp.ne.s32.totalorder %s185, %s187
      %p191 = scmp.eq.s32.totalorder %s20, 0
      %p192 = por %p190, %p191
      %p193 = scmp.ne.s32.totalorder %s185, %s187
      %p194 = scmp.eq.s32.totalorder %s25, 1
      %p195 = por %p193, %p194
      %p196 = scmp.ne.s32.totalorder %s187, %s188
      %p197 = scmp.eq.s32.totalorder %s25, 0
      %p198 = por %p196, %p197
      %p199 = scmp.ne.s32.totalorder %s187, %s188
      %p200 = scmp.eq.s32.totalorder %s26, 1
      %p201 = por %p199, %p200
      %p203 = scmp.ne.s32.totalorder %s188, %s202
      %p204 = scmp.eq.s32.totalorder %s26, 0
      %p205 = por %p203, %p204
      %s207 = sadd.s32 %s206, 1
      %p210 = scmp.eq.s32.totalorder %s20, 1
      %p211 = scmp.ne.s32.totalorder %s206, %s208
      %p212 = scmp.eq.s32.totalorder %s20, 0
      %p213 = por %p211, %p212
      %p214 = scmp.ne.s32.totalorder %s206, %s208
      %p215 = scmp.eq.s32.totalorder %s25, 1
      %p216 = por %p214, %p215
      %p217 = scmp.ne.s32.totalorder %s208, %s209
      %p218 = scmp.eq.s32.totalorder %s25, 0
      %p219 = por %p217, %p218
      %p220 = scmp.ne.s32.totalorder %s208, %s209
      %p221 = scmp.eq.s32.totalorder %s26, 1
      %p222 = por %p220, %p221
      %p224 = scmp.ne.s32.totalorder %s209, %s223
      %p225 = scmp.eq.s32.totalorder %s26, 0
      %p226 = por %p224, %p225
      %s228 = sadd.s32 %s227, 1
      %p231 = scmp.eq.s32.totalorder %s20, 1
      %p232 = scmp.ne.s32.totalorder %s227, %s229
      %p233 = scmp.eq.s32.totalorder %s20, 0
      %p234 = por %p232, %p233
      %p235 = scmp.ne.s32.totalorder %s227, %s229
      %p236 = scmp.eq.s32.totalorder %s25, 1
      %p237 = por %p235, %p236
      %p238 = scmp.ne.s32.totalorder %s229, %s230
      %p239 = scmp.eq.s32.totalorder %s25, 0
      %p240 = por %p238, %p239
      %p241 = scmp.ne.s32.totalorder %s229, %s230
      %p242 = scmp.eq.s32.totalorder %s26, 1
      %p243 = por %p241, %p242
      %p245 = scmp.ne.s32.totalorder %s230, %s244
      %p246 = scmp.eq.s32.totalorder %s26, 0
      %p247 = por %p245, %p246
      %s248 = ssub.s32 %s20, %s27
      %p249 = scmp.eq.s32.totalorder %s248, 0
      %s251 = sadd.s32 %s250, 1
      %s252 = scalar_select %p249, %s250, %s251
      %p255 = pneg %p249
      %p256 = scmp.eq.s32.totalorder %s20, 1
      %p257 = por %p255, %p256
      %p258 = scmp.ne.s32.totalorder %s250, %s253
      %p259 = scmp.eq.s32.totalorder %s20, 0
      %p260 = por %p258, %p259
      %p261 = scmp.ne.s32.totalorder %s250, %s253
      %p262 = scmp.eq.s32.totalorder %s25, 1
      %p263 = por %p261, %p262
      %p264 = scmp.ne.s32.totalorder %s253, %s254
      %p265 = scmp.eq.s32.totalorder %s25, 0
      %p266 = por %p264, %p265
      %p267 = scmp.ne.s32.totalorder %s253, %s254
      %p268 = scmp.eq.s32.totalorder %s26, 1
      %p269 = por %p267, %p268
      %p271 = scmp.ne.s32.totalorder %s254, %s270
      %p272 = scmp.eq.s32.totalorder %s26, 0
      %p273 = por %p271, %p272
      %p274 = scmp.le.s32.totalorder 1, %s20
      %p275 = scmp.lt.s32.totalorder %s20, 3
      %p276 = pnand %p274, %p275
      %p277 = pneg %p276
      // Predicated region
      $region9: #{tpu_custom_call.1} parent=5 // pred_check
        _
      $region10: #{tpu_custom_call.1} parent=5 // pred_check_branch
        %279 = sbr.rel (%p276) target = $region12
      $region11: #{tpu_custom_call.1} parent=5 // pred_region
        %s280 = ssub.s32 %s20, 1
        // Predicated region
        $region13: #{tpu_custom_call.1} parent=11 // pred_check
          %p281 = pneg %p93
        $region14: #{tpu_custom_call.1} parent=11 // pred_check_branch
          %283 = sbr.rel (%p281) target = $region16
        $region15: #{tpu_custom_call.1} parent=11 // pred_region
          _
        $region16: #{tpu_custom_call.1} parent=11 // pred_fallthru
          _
        // Predicated region
        $region17: #{tpu_custom_call.1} parent=11 // pred_check
          %p284 = pneg %p114
        $region18: #{tpu_custom_call.1} parent=11 // pred_check_branch
          %286 = sbr.rel (%p284) target = $region20
        $region19: #{tpu_custom_call.1} parent=11 // pred_region
          _
        $region20: #{tpu_custom_call.1} parent=11 // pred_fallthru
          _
        // Predicated region
        $region21: #{tpu_custom_call.1} parent=11 // pred_check
          %p287 = pneg %p135
        $region22: #{tpu_custom_call.1} parent=11 // pred_check_branch
          %289 = sbr.rel (%p287) target = $region24
        $region23: #{tpu_custom_call.1} parent=11 // pred_region
          _
        $region24: #{tpu_custom_call.1} parent=11 // pred_fallthru
          _
        // Predicated region
        $region25: #{tpu_custom_call.1} parent=11 // pred_check
          %p290 = pneg %p156
        $region26: #{tpu_custom_call.1} parent=11 // pred_check_branch
          %292 = sbr.rel (%p290) target = $region28
        $region27: #{tpu_custom_call.1} parent=11 // pred_region
          _
        $region28: #{tpu_custom_call.1} parent=11 // pred_fallthru
          _
        // Predicated region
        $region29: #{tpu_custom_call.1} parent=11 // pred_check
          %p293 = pneg %p177
        $region30: #{tpu_custom_call.1} parent=11 // pred_check_branch
          %295 = sbr.rel (%p293) target = $region32
        $region31: #{tpu_custom_call.1} parent=11 // pred_region
          _
        $region32: #{tpu_custom_call.1} parent=11 // pred_fallthru
          _
        // Predicated region
        $region33: #{tpu_custom_call.1} parent=11 // pred_check
          %p296 = pneg %p198
        $region34: #{tpu_custom_call.1} parent=11 // pred_check_branch
          %298 = sbr.rel (%p296) target = $region36
        $region35: #{tpu_custom_call.1} parent=11 // pred_region
          _
        $region36: #{tpu_custom_call.1} parent=11 // pred_fallthru
          _
        // Predicated region
        $region37: #{tpu_custom_call.1} parent=11 // pred_check
          %p299 = pneg %p219
        $region38: #{tpu_custom_call.1} parent=11 // pred_check_branch
          %301 = sbr.rel (%p299) target = $region40
        $region39: #{tpu_custom_call.1} parent=11 // pred_region
          _
        $region40: #{tpu_custom_call.1} parent=11 // pred_fallthru
          _
        // Predicated region
        $region41: #{tpu_custom_call.1} parent=11 // pred_check
          %p302 = pneg %p240
        $region42: #{tpu_custom_call.1} parent=11 // pred_check_branch
          %304 = sbr.rel (%p302) target = $region44
        $region43: #{tpu_custom_call.1} parent=11 // pred_region
          %s306 = ssub.s32 16, 16
          %307 = vsyncadd [#allocation5], %s306
          %s309 = sshll.u32 %s9, 4
          %s310 = int_to_ptr.vmem [resolvable:$true] %s309
          %312 = dma.vmem_to_smem %s310, 16, [#allocation3], [#allocation5]
        $region44: #{tpu_custom_call.1} parent=11 // pred_fallthru
          _
      $region12: #{tpu_custom_call.1} parent=5 // pred_fallthru
        _
      %p313 = scmp.lt.s32.totalorder %s20, 2
      // Predicated region
      $region45: #{tpu_custom_call.1} parent=5 // pred_check
        %p314 = pneg %p313
      $region46: #{tpu_custom_call.1} parent=5 // pred_check_branch
        %316 = sbr.rel (%p314) target = $region48
      $region47: #{tpu_custom_call.1} parent=5 // pred_region
        // Predicated region
        $region49: #{tpu_custom_call.1} parent=47 // pred_check
          %p317 = pneg %p40
        $region50: #{tpu_custom_call.1} parent=47 // pred_check_branch
          %319 = sbr.rel (%p317) target = $region52
        $region51: #{tpu_custom_call.1} parent=47 // pred_region
          %p320 = scmp.lt.s32.totalorder %s20, 1
          %s321 = scalar_select %p320, %s20, 1
          %s322 = smul.addr %s321, 2
          %s323 = smul.addr %s322, 4
          %s324 = scalar_lea.vmem %s0, %s323
        $region52: #{tpu_custom_call.1} parent=47 // pred_fallthru
          _
        // Predicated region
        $region53: #{tpu_custom_call.1} parent=47 // pred_check
          %p325 = pneg %p66
        $region54: #{tpu_custom_call.1} parent=47 // pred_check_branch
          %327 = sbr.rel (%p325) target = $region56
        $region55: #{tpu_custom_call.1} parent=47 // pred_region
          %p328 = scmp.lt.s32.totalorder %s20, 1
          %s329 = scalar_select %p328, %s20, 1
          %s330 = smul.addr %s329, 2
          %s331 = smul.addr %s330, 8
          %s332 = scalar_lea.vmem %s1, %s331
        $region56: #{tpu_custom_call.1} parent=47 // pred_fallthru
          _
      $region48: #{tpu_custom_call.1} parent=5 // pred_fallthru
        _
      %p333 = scmp.le.s32.totalorder 1, %s20
      %p334 = scmp.lt.s32.totalorder %s20, 3
      %p335 = pnand %p333, %p334
      %p336 = pneg %p335
      // Predicated region
      $region57: #{tpu_custom_call.1} parent=5 // pred_check
        _
      $region58: #{tpu_custom_call.1} parent=5 // pred_check_branch
        %338 = sbr.rel (%p335) target = $region60
      $region59: #{tpu_custom_call.1} parent=5 // pred_region
        %s339 = ssub.s32 %s20, 1
        // Predicated region
        $region61: #{tpu_custom_call.1} parent=59 // pred_check
          %p340 = pneg %p240
        $region62: #{tpu_custom_call.1} parent=59 // pred_check_branch
          %342 = sbr.rel (%p340) target = $region64
        $region63: #{tpu_custom_call.1} parent=59 // pred_region
          %343 = dma.done [#allocation5], 16
        $region64: #{tpu_custom_call.1} parent=59 // pred_fallthru
          _
        %344 = sfence
        %p345 = scmp.lt.s32.totalorder %s25, 1
        %s346 = scalar_select %p345, %s25, 1
        %s347 = smul.addr %s346, 2
        %s348 = smul.addr %s347, 4
        %s349 = scalar_lea.vmem %s0, %s348
        %p350 = pneg %p46
        %p351 = pneg %p43
        %p352 = scmp.lt.s32.totalorder %s25, 1
        %s353 = scalar_select %p352, %s25, 1
        %s354 = smul.addr %s353, 2
        %s355 = smul.addr %s354, 8
        %s356 = scalar_lea.vmem %s1, %s355
        %p357 = pneg %p72
        %p358 = pneg %p69
        %p359 = pneg %p93
        %p360 = pneg %p90
        %p361 = pneg %p114
        %p362 = pneg %p111
        %p363 = pneg %p135
        %p364 = pneg %p132
        %p365 = pneg %p156
        %p366 = pneg %p153
        %p367 = pneg %p177
        %p368 = pneg %p174
        %p369 = pneg %p198
        %p370 = pneg %p195
        %p371 = pneg %p219
        %p372 = pneg %p216
        %p373 = pneg %p240
        %p374 = pneg %p237
        %p375 = pneg %p266
        %p376 = pneg %p263
        %s377 = sand.u32 %s253, 1
        %s378 = scalar_lea.sflag [#allocation4], %s377
        %s379 = sand.u32 %s253, 1
        %s380 = smul.addr %s379, 16
        %s381 = scalar_lea.vmem [#allocation6], %s380
        %p382 = scmp.lt.s32.totalorder %s25, 1
        %s383 = scalar_select %p382, %s25, 1
        %s384 = smul.addr %s383, 2
        %s385 = smul.addr %s384, 4
        %s386 = scalar_lea.vmem %s0, %s385
        %p387 = scmp.lt.s32.totalorder %s25, 1
        %s388 = scalar_select %p387, %s25, 1
        %s389 = smul.addr %s388, 2
        %s390 = smul.addr %s389, 8
        %s391 = scalar_lea.vmem %s1, %s390
        %s393 = sld [smem:[#allocation3]]
        %s394 = sld [smem:[#allocation3 + $0x1]]
        %s395 = sld [smem:[#allocation3 + $0x2]]
        %v396 = vld [vmem:[%s3] sm:$0x3]
        %v397 = vld [vmem:[%s386] sm:$0xff]
        %v398 = vld [vmem:[%s6] sm:$0xf]
        %400 = vset.pattern.permute.xlu0 0
        %401 = vperm.xlu0 %400, %v398
        %v402 = vpop.permute.xlu0 %401
        %v405 = vunpack.c.l.b16 %v397
        %v406 = vunpack.c.h.b16 %v397
        %v407 = vpack.c.b16 %v405, %v405
        %v408 = vpack.c.b16 %v406, %v406
        %vm409 = vcmask 64512
        %v411 = vsel %vm409, %v396, 0
        %vm413 = vcmask 1043456
        %v415 = vsel %vm413, %v407, 0
        %v418 = vsel %vm413, %v408, 0
        %420 = vmatprep.subr.bf16.mxu0 %v418
        %421 = vmatpush1.bf16.msra.mxu0 %v415
        %422 = vmatprep.subr.bf16.mxu0 0
        %423 = vmatpush1.bf16.msra.mxu0 0
        %424 = vmatprep.subr.bf16.mxu0 0
        %425 = vmatpush1.bf16.msra.mxu0 0
        %426 = vmatprep.subr.bf16.mxu0 0
        %427 = vmatpush1.bf16.msra.mxu0 0
        %428 = vmatprep.subr.bf16.mxu0 0
        %429 = vmatpush1.bf16.msra.mxu0 0
        %430 = vmatprep.subr.bf16.mxu0 0
        %431 = vmatpush1.bf16.msra.mxu0 0
        %432 = vmatprep.subr.bf16.mxu0 0
        %433 = vmatpush1.bf16.msra.mxu0 0
        %434 = vmatprep.subr.bf16.mxu0 0
        %435 = vmatpush1.bf16.msra.mxu0 0
        %436 = vmatprep.subr.bf16.mxu0 0
        %437 = vmatpush1.bf16.msra.mxu0 0
        %438 = vmatprep.subr.bf16.mxu0 0
        %439 = vmatpush1.bf16.msra.mxu0 0
        %440 = vmatprep.subr.bf16.mxu0 0
        %441 = vmatpush1.bf16.msra.mxu0 0
        %442 = vmatprep.subr.bf16.mxu0 0
        %443 = vmatpush1.bf16.msra.mxu0 0
        %444 = vmatprep.subr.bf16.mxu0 0
        %445 = vmatpush1.bf16.msra.mxu0 0
        %446 = vmatprep.subr.bf16.mxu0 0
        %447 = vmatpush1.bf16.msra.mxu0 0
        %448 = vmatprep.subr.bf16.mxu0 0
        %449 = vmatpush1.bf16.msra.mxu0 0
        %450 = vmatprep.subr.bf16.mxu0 0
        %451 = vmatpush1.bf16.msra.mxu0 0
        %452 = vmatprep.mubr.bf16.mxu0 0
        %453 = vmatmul.mubr.bf16.gmra.mrb[0].mxu0 %v411
        %v454 = vpop.f32.mrb[0].mxu0
        %v455 = vadd.f32 %v402, %v454
        %v456 = vpop.f32.mrb[0].mxu0
        %v457 = vadd.f32 %v402, %v456
        %v458 = vpop.f32.mrb[0].mxu0
        %v459 = vpop.f32.mrb[0].mxu0
        %460 = vdwg.mxu0
        %vm461 = vcmp.gt.f32.partialorder %v455, 0.0
        %vm462 = vcmp.gt.f32.partialorder %v457, 0.0
        %v463 = vstv %s393
        %v464 = vmul.f32 %v463, %v455
        %v465 = vmul.f32 %v463, %v457
        %v466 = vsel %vm461, %v455, %v464
        %v467 = vsel %vm462, %v457, %v465
        %468 = vst [vmem:[#allocation2] sm:$0x3] 0
        %469 = vst [vmem:[#allocation2 + $0x6] sm:$0x3] 0
        %v470 = vpack.c.bf16 %v466, %v466
        %v471 = vpack.c.bf16 %v467, %v467
        %v474 = vcombine.low %v470, %v471
        %v476 = vunpack.c.l.s4 1983009808
        %v477 = vunpack.c.0.s8 %v476
        %v478 = vlaneseq
        %v479 = vshrl.u32 %v478, 7
        %v480 = vsub.s32 %v477, %v479
        %v481 = vrot.slane %v474, %v480
        %483 = vst [vmem:[#allocation2 + $0x2] sm:$0xf] %v481
        %v484 = vld [vmem:[%s2] sm:$0x3]
        %v485 = vld [vmem:[#allocation2] sm:$0x3f]
        %v488 = vunpack.c.l.s4 1966171168
        %v489 = vunpack.c.0.s8 %v488
        %v490 = vlaneseq
        %v491 = vshrl.u32 %v490, 7
        %v492 = vsub.s32 %v489, %v491
        %v493 = vrot.slane %v484, %v492
        %v494 = vcombine.high %v493, %v493
        %v496 = vunpack.c.l.s4 1966171168
        %v497 = vunpack.c.0.s8 %v496
        %v498 = vlaneseq
        %v499 = vshrl.u32 %v498, 7
        %v500 = vsub.s32 %v497, %v499
        %v501 = vrot.slane %v493, %v500
        %v503 = vunpack.c.l.s4 1966171168
        %v504 = vunpack.c.0.s8 %v503
        %v505 = vlaneseq
        %v506 = vshrl.u32 %v505, 7
        %v507 = vsub.s32 %v504, %v506
        %v508 = vrot.slane %v494, %v507
        %v510 = vpack.i.b16 %v501, %v501
        %v512 = vlaneseq
        %v513 = vshrl.u32 %v512, 7
        %v514 = vsub.s32 0, %v513
        %v515 = vrot.slane %v510, %v514
        %v517 = vpack.i.b16 %v508, %v508
        %v519 = vlaneseq
        %v520 = vshrl.u32 %v519, 7
        %v521 = vsub.s32 0, %v520
        %v522 = vrot.slane %v517, %v521
        %v525 = vcombine.low %v515, %v522
        %v527 = vunpack.c.l.s4 1983009808
        %v528 = vunpack.c.0.s8 %v527
        %v529 = vlaneseq
        %v530 = vshrl.u32 %v529, 7
        %v531 = vsub.s32 %v528, %v530
        %v532 = vrot.slane %v525, %v531
        %533 = vrot.lane.b32.xlu0 %v532, 111
        %v534 = vpop.permute.xlu0 %533
        %v535 = vrot.slane %v534, 6
        %vm536 = vcmask 908288
        %v537 = vsel %vm536, %v535, %v534
        %v539 = vmul.bf16 %v485, %v537
        %v540 = vld [vmem:[%s4] sm:$0x3]
        %s541 = scalar_lea.vmem %s4, 2
        %v542 = vld [vmem:[%s541] sm:$0x3]
        %v544 = vcombine.high %v485, %v485
        %v546 = vunpack.c.l.s4 1983009808
        %v547 = vunpack.c.0.s8 %v546
        %v548 = vlaneseq
        %v549 = vshrl.u32 %v548, 7
        %v550 = vsub.s32 %v547, %v549
        %v551 = vrot.slane %v485, %v550
        %v553 = vunpack.c.l.s4 1983009808
        %v554 = vunpack.c.0.s8 %v553
        %v555 = vlaneseq
        %v556 = vshrl.u32 %v555, 7
        %v557 = vsub.s32 %v554, %v556
        %v558 = vrot.slane %v544, %v557
        %v559 = vcombine.high %v551, %v551
        %560 = vrot.lane.b32.xlu0 %v551, 16
        %v561 = vpop.permute.xlu0 %560
        %562 = vrot.lane.b32.xlu0 %v559, 16
        %v563 = vpop.permute.xlu0 %562
        %564 = vrot.lane.b32.xlu0 %v558, 16
        %v565 = vpop.permute.xlu0 %564
        %vm566 = vcmask 130048
        %v567 = vsel %vm566, %v561, %v563
        %v568 = vsel %vm566, %v563, %v565
        %vm569 = vcmask 31744
        %v571 = vsel %vm569, %v542, 0
        %vm573 = vcmask 1041408
        %v575 = vsel %vm573, %v567, 0
        %v578 = vsel %vm573, %v568, 0
        %580 = vmatprep.subr.bf16.mxu0 %v578
        %581 = vmatpush1.bf16.msra.mxu0 %v575
        %582 = vmatprep.subr.bf16.mxu0 0
        %583 = vmatpush1.bf16.msra.mxu0 0
        %584 = vmatprep.subr.bf16.mxu0 0
        %585 = vmatpush1.bf16.msra.mxu0 0
        %586 = vmatprep.subr.bf16.mxu0 0
        %587 = vmatpush1.bf16.msra.mxu0 0
        %588 = vmatprep.subr.bf16.mxu0 0
        %589 = vmatpush1.bf16.msra.mxu0 0
        %590 = vmatprep.subr.bf16.mxu0 0
        %591 = vmatpush1.bf16.msra.mxu0 0
        %592 = vmatprep.subr.bf16.mxu0 0
        %593 = vmatpush1.bf16.msra.mxu0 0
        %594 = vmatprep.subr.bf16.mxu0 0
        %595 = vmatpush1.bf16.msra.mxu0 0
        %596 = vmatprep.subr.bf16.mxu0 0
        %597 = vmatpush1.bf16.msra.mxu0 0
        %598 = vmatprep.subr.bf16.mxu0 0
        %599 = vmatpush1.bf16.msra.mxu0 0
        %600 = vmatprep.subr.bf16.mxu0 0
        %601 = vmatpush1.bf16.msra.mxu0 0
        %602 = vmatprep.subr.bf16.mxu0 0
        %603 = vmatpush1.bf16.msra.mxu0 0
        %604 = vmatprep.subr.bf16.mxu0 0
        %605 = vmatpush1.bf16.msra.mxu0 0
        %606 = vmatprep.subr.bf16.mxu0 0
        %607 = vmatpush1.bf16.msra.mxu0 0
        %608 = vmatprep.subr.bf16.mxu0 0
        %609 = vmatpush1.bf16.msra.mxu0 0
        %610 = vmatprep.subr.bf16.mxu0 0
        %611 = vmatpush1.bf16.msra.mxu0 0
        %612 = vmatprep.mubr.bf16.mxu0 0
        %613 = vmatmul.mubr.bf16.gmra.mrb[0].mxu0 %v571
        %v614 = vpop.f32.mrb[0].mxu0
        %v615 = vadd.f32 0.0, %v614
        %v616 = vpop.f32.mrb[0].mxu0
        %v617 = vadd.f32 0.0, %v616
        %v618 = vpop.f32.mrb[0].mxu0
        %v619 = vpop.f32.mrb[0].mxu0
        %620 = vdwg.mxu0
        %v622 = vcombine.high %v539, %v539
        %v624 = vunpack.c.l.s4 1983009808
        %v625 = vunpack.c.0.s8 %v624
        %v626 = vlaneseq
        %v627 = vshrl.u32 %v626, 7
        %v628 = vsub.s32 %v625, %v627
        %v629 = vrot.slane %v539, %v628
        %v631 = vunpack.c.l.s4 1983009808
        %v632 = vunpack.c.0.s8 %v631
        %v633 = vlaneseq
        %v634 = vshrl.u32 %v633, 7
        %v635 = vsub.s32 %v632, %v634
        %v636 = vrot.slane %v622, %v635
        %v637 = vcombine.high %v629, %v629
        %638 = vrot.lane.b32.xlu0 %v629, 17
        %v639 = vpop.permute.xlu0 %638
        %640 = vrot.lane.b32.xlu0 %v637, 17
        %v641 = vpop.permute.xlu0 %640
        %642 = vrot.lane.b32.xlu0 %v636, 17
        %v643 = vpop.permute.xlu0 %642
        %vm644 = vcmask 138240
        %v645 = vsel %vm644, %v639, %v641
        %v646 = vsel %vm644, %v641, %v643
        %v648 = vsel %vm569, %v540, 0
        %v651 = vsel %vm573, %v645, 0
        %v654 = vsel %vm573, %v646, 0
        %656 = vmatprep.subr.bf16.mxu0 %v654
        %657 = vmatpush1.bf16.msra.mxu0 %v651
        %658 = vmatprep.subr.bf16.mxu0 0
        %659 = vmatpush1.bf16.msra.mxu0 0
        %660 = vmatprep.subr.bf16.mxu0 0
        %661 = vmatpush1.bf16.msra.mxu0 0
        %662 = vmatprep.subr.bf16.mxu0 0
        %663 = vmatpush1.bf16.msra.mxu0 0
        %664 = vmatprep.subr.bf16.mxu0 0
        %665 = vmatpush1.bf16.msra.mxu0 0
        %666 = vmatprep.subr.bf16.mxu0 0
        %667 = vmatpush1.bf16.msra.mxu0 0
        %668 = vmatprep.subr.bf16.mxu0 0
        %669 = vmatpush1.bf16.msra.mxu0 0
        %670 = vmatprep.subr.bf16.mxu0 0
        %671 = vmatpush1.bf16.msra.mxu0 0
        %672 = vmatprep.subr.bf16.mxu0 0
        %673 = vmatpush1.bf16.msra.mxu0 0
        %674 = vmatprep.subr.bf16.mxu0 0
        %675 = vmatpush1.bf16.msra.mxu0 0
        %676 = vmatprep.subr.bf16.mxu0 0
        %677 = vmatpush1.bf16.msra.mxu0 0
        %678 = vmatprep.subr.bf16.mxu0 0
        %679 = vmatpush1.bf16.msra.mxu0 0
        %680 = vmatprep.subr.bf16.mxu0 0
        %681 = vmatpush1.bf16.msra.mxu0 0
        %682 = vmatprep.subr.bf16.mxu0 0
        %683 = vmatpush1.bf16.msra.mxu0 0
        %684 = vmatprep.subr.bf16.mxu0 0
        %685 = vmatpush1.bf16.msra.mxu0 0
        %686 = vmatprep.subr.bf16.mxu0 0
        %687 = vmatpush1.bf16.msra.mxu0 0
        %688 = vmatprep.mubr.bf16.mxu0 0
        %689 = vmatmul.mubr.bf16.gmra.mrb[0].mxu0 %v648
        %v690 = vpop.f32.mrb[0].mxu0
        %v691 = vadd.f32 %v615, %v690
        %v692 = vpop.f32.mrb[0].mxu0
        %v693 = vadd.f32 %v617, %v692
        %v694 = vpop.f32.mrb[0].mxu0
        %v695 = vpop.f32.mrb[0].mxu0
        %696 = vdwg.mxu0
        %v697 = vld [vmem:[#allocation2] sm:$0x3f]
        %v698 = vshrl.u32 %v501, 16
        %v699 = vpack.i.b16 %v698, %v698
        %v701 = vlaneseq
        %v702 = vshrl.u32 %v701, 7
        %v703 = vsub.s32 0, %v702
        %v704 = vrot.slane %v699, %v703
        %v705 = vshrl.u32 %v508, 16
        %v706 = vpack.i.b16 %v705, %v705
        %v708 = vlaneseq
        %v709 = vshrl.u32 %v708, 7
        %v710 = vsub.s32 0, %v709
        %v711 = vrot.slane %v706, %v710
        %v714 = vcombine.low %v704, %v711
        %v716 = vunpack.c.l.s4 1983009808
        %v717 = vunpack.c.0.s8 %v716
        %v718 = vlaneseq
        %v719 = vshrl.u32 %v718, 7
        %v720 = vsub.s32 %v717, %v719
        %v721 = vrot.slane %v714, %v720
        %722 = vrot.lane.b32.xlu0 %v721, 113
        %v723 = vpop.permute.xlu0 %722
        %v724 = vrot.slane %v723, 6
        %vm725 = vcmask 924672
        %v726 = vsel %vm725, %v724, %v723
        %v728 = vmul.bf16 %v697, %v726
        %s729 = scalar_lea.vmem %s4, 4
        %v730 = vld [vmem:[%s729] sm:$0x3]
        %v732 = vcombine.high %v728, %v728
        %v734 = vunpack.c.l.s4 1983009808
        %v735 = vunpack.c.0.s8 %v734
        %v736 = vlaneseq
        %v737 = vshrl.u32 %v736, 7
        %v738 = vsub.s32 %v735, %v737
        %v739 = vrot.slane %v728, %v738
        %v741 = vunpack.c.l.s4 1983009808
        %v742 = vunpack.c.0.s8 %v741
        %v743 = vlaneseq
        %v744 = vshrl.u32 %v743, 7
        %v745 = vsub.s32 %v742, %v744
        %v746 = vrot.slane %v732, %v745
        %v747 = vcombine.high %v739, %v739
        %748 = vrot.lane.b32.xlu0 %v739, 15
        %v749 = vpop.permute.xlu0 %748
        %750 = vrot.lane.b32.xlu0 %v747, 15
        %v751 = vpop.permute.xlu0 %750
        %752 = vrot.lane.b32.xlu0 %v746, 15
        %v753 = vpop.permute.xlu0 %752
        %vm754 = vcmask 121856
        %v755 = vsel %vm754, %v749, %v751
        %v756 = vsel %vm754, %v751, %v753
        %v758 = vsel %vm569, %v730, 0
        %v761 = vsel %vm573, %v755, 0
        %v764 = vsel %vm573, %v756, 0
        %766 = vmatprep.subr.bf16.mxu0 %v764
        %767 = vmatpush1.bf16.msra.mxu0 %v761
        %768 = vmatprep.subr.bf16.mxu0 0
        %769 = vmatpush1.bf16.msra.mxu0 0
        %770 = vmatprep.subr.bf16.mxu0 0
        %771 = vmatpush1.bf16.msra.mxu0 0
        %772 = vmatprep.subr.bf16.mxu0 0
        %773 = vmatpush1.bf16.msra.mxu0 0
        %774 = vmatprep.subr.bf16.mxu0 0
        %775 = vmatpush1.bf16.msra.mxu0 0
        %776 = vmatprep.subr.bf16.mxu0 0
        %777 = vmatpush1.bf16.msra.mxu0 0
        %778 = vmatprep.subr.bf16.mxu0 0
        %779 = vmatpush1.bf16.msra.mxu0 0
        %780 = vmatprep.subr.bf16.mxu0 0
        %781 = vmatpush1.bf16.msra.mxu0 0
        %782 = vmatprep.subr.bf16.mxu0 0
        %783 = vmatpush1.bf16.msra.mxu0 0
        %784 = vmatprep.subr.bf16.mxu0 0
        %785 = vmatpush1.bf16.msra.mxu0 0
        %786 = vmatprep.subr.bf16.mxu0 0
        %787 = vmatpush1.bf16.msra.mxu0 0
        %788 = vmatprep.subr.bf16.mxu0 0
        %789 = vmatpush1.bf16.msra.mxu0 0
        %790 = vmatprep.subr.bf16.mxu0 0
        %791 = vmatpush1.bf16.msra.mxu0 0
        %792 = vmatprep.subr.bf16.mxu0 0
        %793 = vmatpush1.bf16.msra.mxu0 0
        %794 = vmatprep.subr.bf16.mxu0 0
        %795 = vmatpush1.bf16.msra.mxu0 0
        %796 = vmatprep.subr.bf16.mxu0 0
        %797 = vmatpush1.bf16.msra.mxu0 0
        %798 = vmatprep.mubr.bf16.mxu0 0
        %799 = vmatmul.mubr.bf16.gmra.mrb[0].mxu0 %v758
        %v800 = vpop.f32.mrb[0].mxu0
        %v801 = vadd.f32 0.0, %v800
        %v802 = vpop.f32.mrb[0].mxu0
        %v803 = vadd.f32 0.0, %v802
        %v804 = vpop.f32.mrb[0].mxu0
        %v805 = vpop.f32.mrb[0].mxu0
        %806 = vdwg.mxu0
        %v807 = vadd.f32 %v691, %v801
        %v808 = vadd.f32 %v693, %v803
        %v809 = vld [vmem:[#allocation2] sm:$0x3f]
        %810 = vrot.lane.b32.xlu0 %v532, 127
        %v811 = vpop.permute.xlu0 %810
        %v812 = vrot.slane %v811, 6
        %vm813 = vcmask 1039360
        %v814 = vsel %vm813, %v812, %v811
        %v816 = vmul.bf16 %v809, %v814
        %s817 = scalar_lea.vmem %s4, 6
        %v818 = vld [vmem:[%s817] sm:$0x3]
        %v820 = vcombine.high %v816, %v816
        %v822 = vunpack.c.l.s4 1983009808
        %v823 = vunpack.c.0.s8 %v822
        %v824 = vlaneseq
        %v825 = vshrl.u32 %v824, 7
        %v826 = vsub.s32 %v823, %v825
        %v827 = vrot.slane %v816, %v826
        %v829 = vunpack.c.l.s4 1983009808
        %v830 = vunpack.c.0.s8 %v829
        %v831 = vlaneseq
        %v832 = vshrl.u32 %v831, 7
        %v833 = vsub.s32 %v830, %v832
        %v834 = vrot.slane %v820, %v833
        %v835 = vcombine.high %v827, %v827
        %836 = vrot.lane.b32.xlu0 %v827, 1
        %v837 = vpop.permute.xlu0 %836
        %838 = vrot.lane.b32.xlu0 %v835, 1
        %v839 = vpop.permute.xlu0 %838
        %840 = vrot.lane.b32.xlu0 %v834, 1
        %v841 = vpop.permute.xlu0 %840
        %vm842 = vcmask 7168
        %v843 = vsel %vm842, %v837, %v839
        %v844 = vsel %vm842, %v839, %v841
        %v846 = vsel %vm569, %v818, 0
        %v849 = vsel %vm573, %v843, 0
        %v852 = vsel %vm573, %v844, 0
        %854 = vmatprep.subr.bf16.mxu0 %v852
        %855 = vmatpush1.bf16.msra.mxu0 %v849
        %856 = vmatprep.subr.bf16.mxu0 0
        %857 = vmatpush1.bf16.msra.mxu0 0
        %858 = vmatprep.subr.bf16.mxu0 0
        %859 = vmatpush1.bf16.msra.mxu0 0
        %860 = vmatprep.subr.bf16.mxu0 0
        %861 = vmatpush1.bf16.msra.mxu0 0
        %862 = vmatprep.subr.bf16.mxu0 0
        %863 = vmatpush1.bf16.msra.mxu0 0
        %864 = vmatprep.subr.bf16.mxu0 0
        %865 = vmatpush1.bf16.msra.mxu0 0
        %866 = vmatprep.subr.bf16.mxu0 0
        %867 = vmatpush1.bf16.msra.mxu0 0
        %868 = vmatprep.subr.bf16.mxu0 0
        %869 = vmatpush1.bf16.msra.mxu0 0
        %870 = vmatprep.subr.bf16.mxu0 0
        %871 = vmatpush1.bf16.msra.mxu0 0
        %872 = vmatprep.subr.bf16.mxu0 0
        %873 = vmatpush1.bf16.msra.mxu0 0
        %874 = vmatprep.subr.bf16.mxu0 0
        %875 = vmatpush1.bf16.msra.mxu0 0
        %876 = vmatprep.subr.bf16.mxu0 0
        %877 = vmatpush1.bf16.msra.mxu0 0
        %878 = vmatprep.subr.bf16.mxu0 0
        %879 = vmatpush1.bf16.msra.mxu0 0
        %880 = vmatprep.subr.bf16.mxu0 0
        %881 = vmatpush1.bf16.msra.mxu0 0
        %882 = vmatprep.subr.bf16.mxu0 0
        %883 = vmatpush1.bf16.msra.mxu0 0
        %884 = vmatprep.subr.bf16.mxu0 0
        %885 = vmatpush1.bf16.msra.mxu0 0
        %886 = vmatprep.mubr.bf16.mxu0 0
        %887 = vmatmul.mubr.bf16.gmra.mrb[0].mxu0 %v846
        %v888 = vpop.f32.mrb[0].mxu0
        %v889 = vadd.f32 0.0, %v888
        %v890 = vpop.f32.mrb[0].mxu0
        %v891 = vadd.f32 0.0, %v890
        %v892 = vpop.f32.mrb[0].mxu0
        %v893 = vpop.f32.mrb[0].mxu0
        %894 = vdwg.mxu0
        %v895 = vadd.f32 %v807, %v889
        %v896 = vadd.f32 %v808, %v891
        %v897 = vld [vmem:[#allocation2 + $0x2] sm:$0xf]
        %s898 = scalar_lea.vmem %s4, 8
        %v899 = vld [vmem:[%s898] sm:$0x3]
        %v902 = vunpack.c.l.s4 1983009808
        %v903 = vunpack.c.0.s8 %v902
        %v904 = vlaneseq
        %v905 = vshrl.u32 %v904, 7
        %v906 = vsub.s32 %v903, %v905
        %v907 = vrot.slane %v897, %v906
        %v908 = vcombine.high %v907, %v907
        %v910 = vsel %vm569, %v899, 0
        %v913 = vsel %vm573, %v907, 0
        %v916 = vsel %vm573, %v908, 0
        %918 = vmatprep.subr.bf16.mxu0 %v916
        %919 = vmatpush1.bf16.msra.mxu0 %v913
        %920 = vmatprep.subr.bf16.mxu0 0
        %921 = vmatpush1.bf16.msra.mxu0 0
        %922 = vmatprep.subr.bf16.mxu0 0
        %923 = vmatpush1.bf16.msra.mxu0 0
        %924 = vmatprep.subr.bf16.mxu0 0
        %925 = vmatpush1.bf16.msra.mxu0 0
        %926 = vmatprep.subr.bf16.mxu0 0
        %927 = vmatpush1.bf16.msra.mxu0 0
        %928 = vmatprep.subr.bf16.mxu0 0
        %929 = vmatpush1.bf16.msra.mxu0 0
        %930 = vmatprep.subr.bf16.mxu0 0
        %931 = vmatpush1.bf16.msra.mxu0 0
        %932 = vmatprep.subr.bf16.mxu0 0
        %933 = vmatpush1.bf16.msra.mxu0 0
        %934 = vmatprep.subr.bf16.mxu0 0
        %935 = vmatpush1.bf16.msra.mxu0 0
        %936 = vmatprep.subr.bf16.mxu0 0
        %937 = vmatpush1.bf16.msra.mxu0 0
        %938 = vmatprep.subr.bf16.mxu0 0
        %939 = vmatpush1.bf16.msra.mxu0 0
        %940 = vmatprep.subr.bf16.mxu0 0
        %941 = vmatpush1.bf16.msra.mxu0 0
        %942 = vmatprep.subr.bf16.mxu0 0
        %943 = vmatpush1.bf16.msra.mxu0 0
        %944 = vmatprep.subr.bf16.mxu0 0
        %945 = vmatpush1.bf16.msra.mxu0 0
        %946 = vmatprep.subr.bf16.mxu0 0
        %947 = vmatpush1.bf16.msra.mxu0 0
        %948 = vmatprep.subr.bf16.mxu0 0
        %949 = vmatpush1.bf16.msra.mxu0 0
        %950 = vmatprep.mubr.bf16.mxu0 0
        %951 = vmatmul.mubr.bf16.gmra.mrb[0].mxu0 %v910
        %v952 = vpop.f32.mrb[0].mxu0
        %v953 = vadd.f32 0.0, %v952
        %v954 = vpop.f32.mrb[0].mxu0
        %v955 = vadd.f32 0.0, %v954
        %v956 = vpop.f32.mrb[0].mxu0
        %v957 = vpop.f32.mrb[0].mxu0
        %958 = vdwg.mxu0
        %v959 = vadd.f32 %v895, %v953
        %v960 = vadd.f32 %v896, %v955
        %v961 = vld [vmem:[#allocation2 + $0x2] sm:$0x3f]
        %962 = vrot.lane.b32.xlu0 %v721, 1
        %v963 = vpop.permute.xlu0 %962
        %v964 = vrot.slane %v963, 6
        %v965 = vsel %vm842, %v964, %v963
        %v967 = vmul.bf16 %v961, %v965
        %s968 = scalar_lea.vmem %s4, 10
        %v969 = vld [vmem:[%s968] sm:$0x3]
        %v971 = vcombine.high %v967, %v967
        %v973 = vunpack.c.l.s4 1983009808
        %v974 = vunpack.c.0.s8 %v973
        %v975 = vlaneseq
        %v976 = vshrl.u32 %v975, 7
        %v977 = vsub.s32 %v974, %v976
        %v978 = vrot.slane %v967, %v977
        %v980 = vunpack.c.l.s4 1983009808
        %v981 = vunpack.c.0.s8 %v980
        %v982 = vlaneseq
        %v983 = vshrl.u32 %v982, 7
        %v984 = vsub.s32 %v981, %v983
        %v985 = vrot.slane %v971, %v984
        %v986 = vcombine.high %v978, %v978
        %987 = vrot.lane.b32.xlu0 %v978, 127
        %v988 = vpop.permute.xlu0 %987
        %989 = vrot.lane.b32.xlu0 %v986, 127
        %v990 = vpop.permute.xlu0 %989
        %991 = vrot.lane.b32.xlu0 %v985, 127
        %v992 = vpop.permute.xlu0 %991
        %v993 = vsel %vm813, %v988, %v990
        %v994 = vsel %vm813, %v990, %v992
        %v996 = vsel %vm569, %v969, 0
        %v999 = vsel %vm573, %v993, 0
        %v1002 = vsel %vm573, %v994, 0
        %1004 = vmatprep.subr.bf16.mxu0 %v1002
        %1005 = vmatpush1.bf16.msra.mxu0 %v999
        %1006 = vmatprep.subr.bf16.mxu0 0
        %1007 = vmatpush1.bf16.msra.mxu0 0
        %1008 = vmatprep.subr.bf16.mxu0 0
        %1009 = vmatpush1.bf16.msra.mxu0 0
        %1010 = vmatprep.subr.bf16.mxu0 0
        %1011 = vmatpush1.bf16.msra.mxu0 0
        %1012 = vmatprep.subr.bf16.mxu0 0
        %1013 = vmatpush1.bf16.msra.mxu0 0
        %1014 = vmatprep.subr.bf16.mxu0 0
        %1015 = vmatpush1.bf16.msra.mxu0 0
        %1016 = vmatprep.subr.bf16.mxu0 0
        %1017 = vmatpush1.bf16.msra.mxu0 0
        %1018 = vmatprep.subr.bf16.mxu0 0
        %1019 = vmatpush1.bf16.msra.mxu0 0
        %1020 = vmatprep.subr.bf16.mxu0 0
        %1021 = vmatpush1.bf16.msra.mxu0 0
        %1022 = vmatprep.subr.bf16.mxu0 0
        %1023 = vmatpush1.bf16.msra.mxu0 0
        %1024 = vmatprep.subr.bf16.mxu0 0
        %1025 = vmatpush1.bf16.msra.mxu0 0
        %1026 = vmatprep.subr.bf16.mxu0 0
        %1027 = vmatpush1.bf16.msra.mxu0 0
        %1028 = vmatprep.subr.bf16.mxu0 0
        %1029 = vmatpush1.bf16.msra.mxu0 0
        %1030 = vmatprep.subr.bf16.mxu0 0
        %1031 = vmatpush1.bf16.msra.mxu0 0
        %1032 = vmatprep.subr.bf16.mxu0 0
        %1033 = vmatpush1.bf16.msra.mxu0 0
        %1034 = vmatprep.subr.bf16.mxu0 0
        %1035 = vmatpush1.bf16.msra.mxu0 0
        %1036 = vmatprep.mubr.bf16.mxu0 0
        %1037 = vmatmul.mubr.bf16.gmra.mrb[0].mxu0 %v996
        %v1038 = vpop.f32.mrb[0].mxu0
        %v1039 = vadd.f32 0.0, %v1038
        %v1040 = vpop.f32.mrb[0].mxu0
        %v1041 = vadd.f32 0.0, %v1040
        %v1042 = vpop.f32.mrb[0].mxu0
        %v1043 = vpop.f32.mrb[0].mxu0
        %1044 = vdwg.mxu0
        %v1045 = vadd.f32 %v959, %v1039
        %v1046 = vadd.f32 %v960, %v1041
        %v1047 = vld [vmem:[#allocation2 + $0x2] sm:$0x3f]
        %1048 = vrot.lane.b32.xlu0 %v532, 15
        %v1049 = vpop.permute.xlu0 %1048
        %v1050 = vrot.slane %v1049, 6
        %v1051 = vsel %vm754, %v1050, %v1049
        %v1053 = vmul.bf16 %v1047, %v1051
        %s1054 = scalar_lea.vmem %s4, 12
        %v1055 = vld [vmem:[%s1054] sm:$0x3]
        %v1057 = vcombine.high %v1053, %v1053
        %v1059 = vunpack.c.l.s4 1983009808
        %v1060 = vunpack.c.0.s8 %v1059
        %v1061 = vlaneseq
        %v1062 = vshrl.u32 %v1061, 7
        %v1063 = vsub.s32 %v1060, %v1062
        %v1064 = vrot.slane %v1053, %v1063
        %v1066 = vunpack.c.l.s4 1983009808
        %v1067 = vunpack.c.0.s8 %v1066
        %v1068 = vlaneseq
        %v1069 = vshrl.u32 %v1068, 7
        %v1070 = vsub.s32 %v1067, %v1069
        %v1071 = vrot.slane %v1057, %v1070
        %v1072 = vcombine.high %v1064, %v1064
        %1073 = vrot.lane.b32.xlu0 %v1064, 113
        %v1074 = vpop.permute.xlu0 %1073
        %1075 = vrot.lane.b32.xlu0 %v1072, 113
        %v1076 = vpop.permute.xlu0 %1075
        %1077 = vrot.lane.b32.xlu0 %v1071, 113
        %v1078 = vpop.permute.xlu0 %1077
        %v1079 = vsel %vm725, %v1074, %v1076
        %v1080 = vsel %vm725, %v1076, %v1078
        %v1082 = vsel %vm569, %v1055, 0
        %v1085 = vsel %vm573, %v1079, 0
        %v1088 = vsel %vm573, %v1080, 0
        %1090 = vmatprep.subr.bf16.mxu0 %v1088
        %1091 = vmatpush1.bf16.msra.mxu0 %v1085
        %1092 = vmatprep.subr.bf16.mxu0 0
        %1093 = vmatpush1.bf16.msra.mxu0 0
        %1094 = vmatprep.subr.bf16.mxu0 0
        %1095 = vmatpush1.bf16.msra.mxu0 0
        %1096 = vmatprep.subr.bf16.mxu0 0
        %1097 = vmatpush1.bf16.msra.mxu0 0
        %1098 = vmatprep.subr.bf16.mxu0 0
        %1099 = vmatpush1.bf16.msra.mxu0 0
        %1100 = vmatprep.subr.bf16.mxu0 0
        %1101 = vmatpush1.bf16.msra.mxu0 0
        %1102 = vmatprep.subr.bf16.mxu0 0
        %1103 = vmatpush1.bf16.msra.mxu0 0
        %1104 = vmatprep.subr.bf16.mxu0 0
        %1105 = vmatpush1.bf16.msra.mxu0 0
        %1106 = vmatprep.subr.bf16.mxu0 0
        %1107 = vmatpush1.bf16.msra.mxu0 0
        %1108 = vmatprep.subr.bf16.mxu0 0
        %1109 = vmatpush1.bf16.msra.mxu0 0
        %1110 = vmatprep.subr.bf16.mxu0 0
        %1111 = vmatpush1.bf16.msra.mxu0 0
        %1112 = vmatprep.subr.bf16.mxu0 0
        %1113 = vmatpush1.bf16.msra.mxu0 0
        %1114 = vmatprep.subr.bf16.mxu0 0
        %1115 = vmatpush1.bf16.msra.mxu0 0
        %1116 = vmatprep.subr.bf16.mxu0 0
        %1117 = vmatpush1.bf16.msra.mxu0 0
        %1118 = vmatprep.subr.bf16.mxu0 0
        %1119 = vmatpush1.bf16.msra.mxu0 0
        %1120 = vmatprep.subr.bf16.mxu0 0
        %1121 = vmatpush1.bf16.msra.mxu0 0
        %1122 = vmatprep.mubr.bf16.mxu0 0
        %1123 = vmatmul.mubr.bf16.gmra.mrb[0].mxu0 %v1082
        %v1124 = vpop.f32.mrb[0].mxu0
        %v1125 = vadd.f32 0.0, %v1124
        %v1126 = vpop.f32.mrb[0].mxu0
        %v1127 = vadd.f32 0.0, %v1126
        %v1128 = vpop.f32.mrb[0].mxu0
        %v1129 = vpop.f32.mrb[0].mxu0
        %1130 = vdwg.mxu0
        %v1131 = vadd.f32 %v1045, %v1125
        %v1132 = vadd.f32 %v1046, %v1127
        %v1133 = vld [vmem:[#allocation2 + $0x2] sm:$0x3f]
        %s1134 = scalar_lea.vmem %s4, 14
        %v1135 = vld [vmem:[%s1134] sm:$0x3]
        %v1137 = vcombine.high %v1133, %v1133
        %v1139 = vunpack.c.l.s4 1983009808
        %v1140 = vunpack.c.0.s8 %v1139
        %v1141 = vlaneseq
        %v1142 = vshrl.u32 %v1141, 7
        %v1143 = vsub.s32 %v1140, %v1142
        %v1144 = vrot.slane %v1133, %v1143
        %v1146 = vunpack.c.l.s4 1983009808
        %v1147 = vunpack.c.0.s8 %v1146
        %v1148 = vlaneseq
        %v1149 = vshrl.u32 %v1148, 7
        %v1150 = vsub.s32 %v1147, %v1149
        %v1151 = vrot.slane %v1137, %v1150
        %v1152 = vcombine.high %v1144, %v1144
        %1153 = vrot.lane.b32.xlu0 %v1144, 112
        %v1154 = vpop.permute.xlu0 %1153
        %1155 = vrot.lane.b32.xlu0 %v1152, 112
        %v1156 = vpop.permute.xlu0 %1155
        %1157 = vrot.lane.b32.xlu0 %v1151, 112
        %v1158 = vpop.permute.xlu0 %1157
        %vm1159 = vcmask 916480
        %v1160 = vsel %vm1159, %v1154, %v1156
        %v1161 = vsel %vm1159, %v1156, %v1158
        %v1163 = vsel %vm569, %v1135, 0
        %v1166 = vsel %vm573, %v1160, 0
        %v1169 = vsel %vm573, %v1161, 0
        %1171 = vmatprep.subr.bf16.mxu0 %v1169
        %1172 = vmatpush1.bf16.msra.mxu0 %v1166
        %1173 = vmatprep.subr.bf16.mxu0 0
        %1174 = vmatpush1.bf16.msra.mxu0 0
        %1175 = vmatprep.subr.bf16.mxu0 0
        %1176 = vmatpush1.bf16.msra.mxu0 0
        %1177 = vmatprep.subr.bf16.mxu0 0
        %1178 = vmatpush1.bf16.msra.mxu0 0
        %1179 = vmatprep.subr.bf16.mxu0 0
        %1180 = vmatpush1.bf16.msra.mxu0 0
        %1181 = vmatprep.subr.bf16.mxu0 0
        %1182 = vmatpush1.bf16.msra.mxu0 0
        %1183 = vmatprep.subr.bf16.mxu0 0
        %1184 = vmatpush1.bf16.msra.mxu0 0
        %1185 = vmatprep.subr.bf16.mxu0 0
        %1186 = vmatpush1.bf16.msra.mxu0 0
        %1187 = vmatprep.subr.bf16.mxu0 0
        %1188 = vmatpush1.bf16.msra.mxu0 0
        %1189 = vmatprep.subr.bf16.mxu0 0
        %1190 = vmatpush1.bf16.msra.mxu0 0
        %1191 = vmatprep.subr.bf16.mxu0 0
        %1192 = vmatpush1.bf16.msra.mxu0 0
        %1193 = vmatprep.subr.bf16.mxu0 0
        %1194 = vmatpush1.bf16.msra.mxu0 0
        %1195 = vmatprep.subr.bf16.mxu0 0
        %1196 = vmatpush1.bf16.msra.mxu0 0
        %1197 = vmatprep.subr.bf16.mxu0 0
        %1198 = vmatpush1.bf16.msra.mxu0 0
        %1199 = vmatprep.subr.bf16.mxu0 0
        %1200 = vmatpush1.bf16.msra.mxu0 0
        %1201 = vmatprep.subr.bf16.mxu0 0
        %1202 = vmatpush1.bf16.msra.mxu0 0
        %1203 = vmatprep.mubr.bf16.mxu0 0
        %1204 = vmatmul.mubr.bf16.gmra.mrb[0].mxu0 %v1163
        %v1205 = vpop.f32.mrb[0].mxu0
        %v1206 = vadd.f32 0.0, %v1205
        %v1207 = vpop.f32.mrb[0].mxu0
        %v1208 = vadd.f32 0.0, %v1207
        %v1209 = vpop.f32.mrb[0].mxu0
        %v1210 = vpop.f32.mrb[0].mxu0
        %1211 = vdwg.mxu0
        %v1212 = vadd.f32 %v1131, %v1206
        %v1213 = vadd.f32 %v1132, %v1208
        %v1214 = vld [vmem:[#allocation2 + $0x2] sm:$0x3f]
        %1215 = vrot.lane.b32.xlu0 %v721, 17
        %v1216 = vpop.permute.xlu0 %1215
        %v1217 = vrot.slane %v1216, 6
        %v1218 = vsel %vm644, %v1217, %v1216
        %v1220 = vmul.bf16 %v1214, %v1218
        %s1221 = scalar_lea.vmem %s4, 16
        %v1222 = vld [vmem:[%s1221] sm:$0x3]
        %v1224 = vcombine.high %v1220, %v1220
        %v1226 = vunpack.c.l.s4 1983009808
        %v1227 = vunpack.c.0.s8 %v1226
        %v1228 = vlaneseq
        %v1229 = vshrl.u32 %v1228, 7
        %v1230 = vsub.s32 %v1227, %v1229
        %v1231 = vrot.slane %v1220, %v1230
        %v1233 = vunpack.c.l.s4 1983009808
        %v1234 = vunpack.c.0.s8 %v1233
        %v1235 = vlaneseq
        %v1236 = vshrl.u32 %v1235, 7
        %v1237 = vsub.s32 %v1234, %v1236
        %v1238 = vrot.slane %v1224, %v1237
        %v1239 = vcombine.high %v1231, %v1231
        %1240 = vrot.lane.b32.xlu0 %v1231, 111
        %v1241 = vpop.permute.xlu0 %1240
        %1242 = vrot.lane.b32.xlu0 %v1239, 111
        %v1243 = vpop.permute.xlu0 %1242
        %1244 = vrot.lane.b32.xlu0 %v1238, 111
        %v1245 = vpop.permute.xlu0 %1244
        %v1246 = vsel %vm536, %v1241, %v1243
        %v1247 = vsel %vm536, %v1243, %v1245
        %v1249 = vsel %vm569, %v1222, 0
        %v1252 = vsel %vm573, %v1246, 0
        %v1255 = vsel %vm573, %v1247, 0
        %1257 = vmatprep.subr.bf16.mxu0 %v1255
        %1258 = vmatpush1.bf16.msra.mxu0 %v1252
        %1259 = vmatprep.subr.bf16.mxu0 0
        %1260 = vmatpush1.bf16.msra.mxu0 0
        %1261 = vmatprep.subr.bf16.mxu0 0
        %1262 = vmatpush1.bf16.msra.mxu0 0
        %1263 = vmatprep.subr.bf16.mxu0 0
        %1264 = vmatpush1.bf16.msra.mxu0 0
        %1265 = vmatprep.subr.bf16.mxu0 0
        %1266 = vmatpush1.bf16.msra.mxu0 0
        %1267 = vmatprep.subr.bf16.mxu0 0
        %1268 = vmatpush1.bf16.msra.mxu0 0
        %1269 = vmatprep.subr.bf16.mxu0 0
        %1270 = vmatpush1.bf16.msra.mxu0 0
        %1271 = vmatprep.subr.bf16.mxu0 0
        %1272 = vmatpush1.bf16.msra.mxu0 0
        %1273 = vmatprep.subr.bf16.mxu0 0
        %1274 = vmatpush1.bf16.msra.mxu0 0
        %1275 = vmatprep.subr.bf16.mxu0 0
        %1276 = vmatpush1.bf16.msra.mxu0 0
        %1277 = vmatprep.subr.bf16.mxu0 0
        %1278 = vmatpush1.bf16.msra.mxu0 0
        %1279 = vmatprep.subr.bf16.mxu0 0
        %1280 = vmatpush1.bf16.msra.mxu0 0
        %1281 = vmatprep.subr.bf16.mxu0 0
        %1282 = vmatpush1.bf16.msra.mxu0 0
        %1283 = vmatprep.subr.bf16.mxu0 0
        %1284 = vmatpush1.bf16.msra.mxu0 0
        %1285 = vmatprep.subr.bf16.mxu0 0
        %1286 = vmatpush1.bf16.msra.mxu0 0
        %1287 = vmatprep.subr.bf16.mxu0 0
        %1288 = vmatpush1.bf16.msra.mxu0 0
        %1289 = vmatprep.mubr.bf16.mxu0 0
        %1290 = vmatmul.mubr.bf16.gmra.mrb[0].mxu0 %v1249
        %v1291 = vpop.f32.mrb[0].mxu0
        %v1292 = vadd.f32 0.0, %v1291
        %v1293 = vpop.f32.mrb[0].mxu0
        %v1294 = vadd.f32 0.0, %v1293
        %v1295 = vpop.f32.mrb[0].mxu0
        %v1296 = vpop.f32.mrb[0].mxu0
        %1297 = vdwg.mxu0
        %v1298 = vadd.f32 %v1212, %v1292
        %v1299 = vadd.f32 %v1213, %v1294
        %v1300 = vld [vmem:[%s7] sm:$0xf]
        %1302 = vset.pattern.permute.xlu0 0
        %1303 = vperm.xlu0 %1302, %v1300
        %v1304 = vpop.permute.xlu0 %1303
        %v1306 = vadd.f32 %v1298, %v1304
        %v1307 = vadd.f32 %v1299, %v1304
        %vm1308 = vcmp.gt.f32.partialorder %v1306, 0.0
        %vm1309 = vcmp.gt.f32.partialorder %v1307, 0.0
        %v1310 = vstv %s394
        %v1311 = vmul.f32 %v1310, %v1306
        %v1312 = vmul.f32 %v1310, %v1307
        %v1313 = vsel %vm1308, %v1306, %v1311
        %v1314 = vsel %vm1309, %v1307, %v1312
        %v1315 = vld [vmem:[%s5] sm:$0xf]
        %v1316 = vpack.c.bf16 %v1313, %v1313
        %v1317 = vpack.c.bf16 %v1314, %v1314
        %v1318 = vld [vmem:[%s8] sm:$0xff]
        %1320 = vset.pattern.permute.xlu0 0
        %1321 = vperm.xlu0 %1320, %v1318
        %v1322 = vpop.permute.xlu0 %1321
        %v1325 = vsel %vm569, %v1315, 0
        %v1328 = vsel %vm573, %v1316, 0
        %v1331 = vsel %vm573, %v1317, 0
        %1333 = vmatprep.subr.bf16.mxu0 %v1331
        %1334 = vmatpush1.bf16.msra.mxu0 %v1328
        %1335 = vmatprep.subr.bf16.mxu0 0
        %1336 = vmatpush1.bf16.msra.mxu0 0
        %1337 = vmatprep.subr.bf16.mxu0 0
        %1338 = vmatpush1.bf16.msra.mxu0 0
        %1339 = vmatprep.subr.bf16.mxu0 0
        %1340 = vmatpush1.bf16.msra.mxu0 0
        %1341 = vmatprep.subr.bf16.mxu0 0
        %1342 = vmatpush1.bf16.msra.mxu0 0
        %1343 = vmatprep.subr.bf16.mxu0 0
        %1344 = vmatpush1.bf16.msra.mxu0 0
        %1345 = vmatprep.subr.bf16.mxu0 0
        %1346 = vmatpush1.bf16.msra.mxu0 0
        %1347 = vmatprep.subr.bf16.mxu0 0
        %1348 = vmatpush1.bf16.msra.mxu0 0
        %1349 = vmatprep.subr.bf16.mxu0 0
        %1350 = vmatpush1.bf16.msra.mxu0 0
        %1351 = vmatprep.subr.bf16.mxu0 0
        %1352 = vmatpush1.bf16.msra.mxu0 0
        %1353 = vmatprep.subr.bf16.mxu0 0
        %1354 = vmatpush1.bf16.msra.mxu0 0
        %1355 = vmatprep.subr.bf16.mxu0 0
        %1356 = vmatpush1.bf16.msra.mxu0 0
        %1357 = vmatprep.subr.bf16.mxu0 0
        %1358 = vmatpush1.bf16.msra.mxu0 0
        %1359 = vmatprep.subr.bf16.mxu0 0
        %1360 = vmatpush1.bf16.msra.mxu0 0
        %1361 = vmatprep.subr.bf16.mxu0 0
        %1362 = vmatpush1.bf16.msra.mxu0 0
        %1363 = vmatprep.subr.bf16.mxu0 0
        %1364 = vmatpush1.bf16.msra.mxu0 0
        %1365 = vmatprep.mubr.bf16.mxu0 0
        %1366 = vmatmul.mubr.bf16.gmra.mrb[0].mxu0 %v1325
        %v1367 = vpop.f32.mrb[0].mxu0
        %v1368 = vadd.f32 %v1322, %v1367
        %v1369 = vpop.f32.mrb[0].mxu0
        %v1370 = vadd.f32 %v1322, %v1369
        %v1371 = vpop.f32.mrb[0].mxu0
        %v1372 = vpop.f32.mrb[0].mxu0
        %1373 = vdwg.mxu0
        %v1374 = vld [vmem:[%s391] sm:$0xff]
        %v1375 = vld [vmem:[%s391 + $0x8] sm:$0xff]
        %v1376 = vadd.f32 %v1368, %v1374
        %v1377 = vadd.f32 %v1370, %v1375
        %vm1378 = vcmp.gt.f32.partialorder %v1376, 0.0
        %vm1379 = vcmp.gt.f32.partialorder %v1377, 0.0
        %v1380 = vstv %s395
        %v1381 = vmul.f32 %v1380, %v1376
        %v1382 = vmul.f32 %v1380, %v1377
        %v1383 = vsel %vm1378, %v1376, %v1381
        %v1384 = vsel %vm1379, %v1377, %v1382
        %1385 = vst [vmem:[%s381] sm:$0xff] %v1383
        %1386 = vst [vmem:[%s381 + $0x8] sm:$0xff] %v1384
        %s1387 = sand.u32 %s253, 1
        %s1388 = scalar_lea.sflag [#allocation4], %s1387
        %s1389 = sand.u32 %s253, 1
        %s1390 = smul.addr %s1389, 16
        %s1391 = scalar_lea.vmem [#allocation6], %s1390
        // Predicated region
        $region65: #{tpu_custom_call.1} parent=59 // pred_check
          %p1392 = pneg %p263
        $region66: #{tpu_custom_call.1} parent=59 // pred_check_branch
          %1394 = sbr.rel (%p1392) target = $region68
        $region67: #{tpu_custom_call.1} parent=59 // pred_region
          %s1396 = ssub.s32 256, 256
          %1397 = vsyncadd %s1388, %s1396
          %s1398 = smul.addr %s25, 2
          %s1399 = smul.addr %s1398, 128
          %s1400 = scalar_lea.hbm %s10, %s1399
          %s1402 = sshll.u32 %s1391, 4
          %s1403 = int_to_ptr.vmem [resolvable:$true] %s1402
          %1405 = dma.vmem_to_hbm [thread:$0]  %s1403, 256, %s1400, %s1388
        $region68: #{tpu_custom_call.1} parent=59 // pred_fallthru
          _
      $region60: #{tpu_custom_call.1} parent=5 // pred_fallthru
        _
      %p1406 = scmp.le.s32.totalorder 2, %s20
      // Predicated region
      $region69: #{tpu_custom_call.1} parent=5 // pred_check
        %p1407 = pneg %p1406
      $region70: #{tpu_custom_call.1} parent=5 // pred_check_branch
        %1409 = sbr.rel (%p1407) target = $region72
      $region71: #{tpu_custom_call.1} parent=5 // pred_region
        %s1410 = ssub.s32 %s20, 2
        // Predicated region
        $region73: #{tpu_custom_call.1} parent=71 // pred_check
          %p1411 = pneg %p269
        $region74: #{tpu_custom_call.1} parent=71 // pred_check_branch
          %1413 = sbr.rel (%p1411) target = $region76
        $region75: #{tpu_custom_call.1} parent=71 // pred_region
          %s1414 = sand.u32 %s254, 1
          %s1415 = scalar_lea.sflag [#allocation4], %s1414
          %s1416 = sand.u32 %s254, 1
          %s1417 = smul.addr %s1416, 16
          %s1418 = scalar_lea.vmem [#allocation6], %s1417
          %1419 = dma.done %s1415, 256
        $region76: #{tpu_custom_call.1} parent=71 // pred_fallthru
          _
      $region72: #{tpu_custom_call.1} parent=5 // pred_fallthru
        _
    $region6: #{tpu_custom_call.1} parent=1 // loop_footer
      %s24 = sadd.s32 1, %s20
    $region7: #{tpu_custom_call.1} parent=1 // loop_footer_branch
      %19 = sbr.rel target = $region3
    $region8: #{tpu_custom_call.1} parent=1 // loop_exit
      _
    %1420 = vsyncpa [#allocation4], 1
    %s1421 = scalar_lea.sflag [#allocation4], 1
    %1422 = vsyncpa %s1421, 1
    %1423 = vsyncpa [#allocation5], 1
    %s1424 = scalar_lea.sflag [#allocation5], 1
    %1425 = vsyncpa %s1424, 1

</llo_original>
